<compile_context>
chip_gen: v6e
topology: v6e:2x2x1
jax: 0.10.0
libtpu: 0.0.40
codegen_flags: <defaults>
</compile_context>

<pallas_src>
import functools

import jax
import jax.numpy as jnp
from jax.experimental import pallas as pl
from jax.experimental.pallas import tpu as pltpu


def _round_up(n, m):
    return -(-n // m) * m


def _residual_block_kernel(x_ref, omega_ref, phase_ref, a_ref, w_ref, out_ref,
                           rhs_ref, *, num_periods, pc_pad, k2, sin_dtype,
                           arg_via_mxu):
    """One grid step: one batch element, one (large, lane-dense) time tile.

    x_ref   : (1, C, TT)         VMEM input tile (any float dtype; f32 compute)
    omega   : (PC_pad, 1) f32    per-row frequencies  (resident; VPU-arg path)
    phase   : (PC_pad, 1) f32    per-row phases       (resident; VPU-arg path)
    a_ref   : (PC_pad, K2) f32   fused omega/phase arg matrix (resident; MXU-arg path)
    w_ref   : (O, PC_pad+K2)     merged (Agg∘Net | conv3 | bias) weight (resident)
    out_ref : (1, O, TT)         output tile
    rhs_ref : (PC_pad+K2, TT)    sin_dtype scratch: [sin block ; x ; 1 ; 0-pad]
    """
    f32 = jnp.float32
    c, tt = x_ref.shape[1], x_ref.shape[2]

    x = x_ref[0].astype(f32)                                    # (C, TT)

    # xa = [x ; ones ; zero-pad]  — shared by the arg matmul and the residual/bias.
    parts = [x, jnp.ones((1, tt), f32)]
    if k2 > c + 1:
        parts.append(jnp.zeros((k2 - c - 1, tt), f32))
    xa = jnp.concatenate(parts, axis=0)                         # (K2, TT)

    if arg_via_mxu:
        # Sinusoid argument on the MXU (idle slot):
        #   arg[p*C+c, t] = omega[p] * x[c, t] + phase[p]
        arg = jnp.dot(a_ref[...], xa, preferred_element_type=f32)      # (PC_pad, TT)
    else:
        # f32 VPU argument (keeps full precision; used when sin_dtype == f32).
        x_rep = jnp.tile(x, (num_periods, 1))                   # (P*C, TT)
        pad = pc_pad - num_periods * c
        if pad:
            x_rep = jnp.concatenate(
                [x_rep, jnp.zeros((pad, tt), f32)], axis=0)
        arg = omega_ref[...] * x_rep + phase_ref[...]           # (PC_pad, TT)

    # Sinusoid (the VALU-binding op), computed in sin_dtype (bf16 on v6e/v7x
    # roughly halves the binding-slot cost and halves the scratch footprint).
    # Stored straight into the merged-RHS scratch: no extra concat copy.
    rhs_ref[0:pc_pad, :] = jnp.sin(arg.astype(sin_dtype))
    rhs_ref[pc_pad:pc_pad + k2, :] = xa.astype(sin_dtype)

    # Single merged matmul: (Aggregator∘Net) + conv3 residual + bias in one
    # K = PC_pad + K2 contraction, f32 MXU accumulate.
    out = jnp.dot(w_ref[...], rhs_ref[...], preferred_element_type=f32)  # (O, TT)
    out_ref[0] = out.astype(out_ref.dtype)


def _device_tuning():
    """Per-generation knobs derived (best effort) from the local device kind."""
    kind = ""
    try:
        kind = jax.devices()[0].device_kind.lower()
    except Exception:
        pass
    if "v4" in kind or "v5" in kind:
        # 128 MiB VMEM, no bf16 VPU -> f32 sin, large time tiles.
        return dict(sin_dtype=jnp.float32, t_cap=32768,
                    vmem_limit=96 * 1024 * 1024, min_steps=2)
    if "v6" in kind:
        # 128 MiB VMEM, bf16 VPU/MXU.
        return dict(sin_dtype=jnp.bfloat16, t_cap=32768,
                    vmem_limit=96 * 1024 * 1024, min_steps=2)
    if "7" in kind:
        # 64 MiB VMEM, 2 TensorCores -> smaller tiles, keep both cores fed.
        return dict(sin_dtype=jnp.bfloat16, t_cap=8192,
                    vmem_limit=48 * 1024 * 1024, min_steps=8)
    # Unknown device: conservative defaults.
    return dict(sin_dtype=jnp.float32, t_cap=8192, vmem_limit=None, min_steps=2)


def _choose_t_tile(T, B, *, cap, min_steps):
    """Largest lane-dense (multiple-of-128) divisor of T <= cap, shrunk if
    needed so the grid has >= min_steps steps (feeds both v7x TensorCores)."""
    if T % 128 != 0:
        # TODO(synk): ragged T should use a pl.cdiv grid + masked tail instead
        # of falling back to a single whole-T tile.
        return T
    divisors = [tt for tt in range(128, min(cap, T) + 1, 128) if T % tt == 0]
    if not divisors:
        return T
    for tt in sorted(divisors, reverse=True):
        if B * (T // tt) >= min_steps:
            return tt
    return divisors[0]


def residual_block(x, params, *, t_tile=None, out_dtype=None, sin_dtype=None):
    """x: (B, C, T) float32/bfloat16 -> (B, O, T) in out_dtype (default x.dtype).

    sin_dtype controls the dtype of the sinusoid block / merged-matmul RHS and
    weights (f32 accumulation regardless).  Default: bf16 on v6e/v7x, f32 on
    v5e / unknown devices.
    """
    B, C, T = x.shape
    omega, phase, aggw, aggb, wnet, bnet, w3, b3 = params
    P = int(omega.shape[0])
    O = int(wnet.shape[0])
    f32 = jnp.float32

    tune = _device_tuning()
    sin_dtype = jnp.dtype(tune["sin_dtype"] if sin_dtype is None else sin_dtype)
    out_dtype = jnp.dtype(x.dtype if out_dtype is None else out_dtype)
    # MXU argument construction only when sin itself is bf16: the bf16 cast
    # already bounds argument precision, so the MXU route loses nothing there.
    arg_via_mxu = (sin_dtype == jnp.dtype(jnp.bfloat16))

    PC = P * C
    PC_pad = _round_up(PC, 16)       # sublane-aligned split point in the scratch
    K2 = _round_up(C + 1, 16)        # x rows + ones row, padded to alignment

    # --- trace-time weight/bias fusion (done once by XLA, negligible cost) ---
    # W_fused[o, p*C + c] = aggw[p] * wnet[o, c]
    w_fused = (aggw.astype(f32)[:, None, None] * wnet.astype(f32)[None, :, :])
    w_fused = jnp.transpose(w_fused, (1, 0, 2)).reshape(O, PC)
    # b_total = b3 + aggb + (sum_p aggw[p]) * bnet   (Net bias through Aggregator)
    b_total = (b3.astype(f32) + aggb.astype(f32)[0]
               + jnp.sum(aggw.astype(f32)) * bnet.astype(f32))          # (O,)
    # Merged weight: cols [0,PC) -> sin block, [PC_pad,PC_pad+C) -> conv3
    # residual, col PC_pad+C -> bias (multiplies the ones row), rest zero.
    w_all = jnp.zeros((O, PC_pad + K2), f32)
    w_all = w_all.at[:, :PC].set(w_fused)
    w_all = w_all.at[:, PC_pad:PC_pad + C].set(w3.astype(f32))
    w_all = w_all.at[:, PC_pad + C].set(b_total)
    w_all = w_all.astype(sin_dtype)

    # Per-row frequency/phase (VPU argument path); zero padding rows -> sin(0)=0.
    omega_rows = jnp.zeros((PC_pad, 1), f32).at[:PC, 0].set(
        jnp.repeat(omega.astype(f32), C))
    phase_rows = jnp.zeros((PC_pad, 1), f32).at[:PC, 0].set(
        jnp.repeat(phase.astype(f32), C))
    # Fused argument matrix (MXU argument path):
    #   A[p*C+c, c] = omega[p],  A[p*C+c, C] = phase[p]
    rows = jnp.arange(PC)
    a_mat = jnp.zeros((PC_pad, K2), f32)
    a_mat = a_mat.at[rows, rows % C].set(jnp.repeat(omega.astype(f32), C))
    a_mat = a_mat.at[rows, C].set(jnp.repeat(phase.astype(f32), C))

    if t_tile is None:
        t_tile = _choose_t_tile(T, B, cap=tune["t_cap"],
                                min_steps=tune["min_steps"])
    assert T % t_tile == 0, (T, t_tile)
    grid = (B, T // t_tile)

    # Advisory cost hint: the sin-heavy transcendental count is otherwise
    # invisible to XLA's scheduler.
    n_elem = B * T
    cost = pl.CostEstimate(
        flops=2 * (PC_pad * K2 + O * (PC_pad + K2)) * n_elem,
        transcendentals=PC_pad * n_elem,
        bytes_accessed=(C * jnp.dtype(x.dtype).itemsize
                        + O * out_dtype.itemsize) * n_elem)

    # Small constant weights: whole-array VMEM residents (no per-step DMA).
    resident = pl.BlockSpec(memory_space=pltpu.MemorySpace.VMEM)
    kernel = functools.partial(
        _residual_block_kernel, num_periods=P, pc_pad=PC_pad, k2=K2,
        sin_dtype=sin_dtype, arg_via_mxu=arg_via_mxu)

    return pl.pallas_call(
        kernel,
        out_shape=jax.ShapeDtypeStruct((B, O, T), out_dtype),
        grid=grid,
        in_specs=[
            pl.BlockSpec((1, C, t_tile), lambda b, i: (b, 0, i)),   # x tile
            resident,   # omega_rows
            resident,   # phase_rows
            resident,   # a_mat
            resident,   # w_all
        ],
        out_specs=pl.BlockSpec((1, O, t_tile), lambda b, i: (b, 0, i)),
        scratch_shapes=[pltpu.VMEM((PC_pad + K2, t_tile), sin_dtype)],
        compiler_params=pltpu.CompilerParams(
            dimension_semantics=("parallel", "parallel"),
            vmem_limit_bytes=tune["vmem_limit"]),
        cost_estimate=cost,
    )(x, omega_rows, phase_rows, a_mat, w_all)


def init_params(key, *, T, input_channels, max_num_periods, out_channels):
    """Deterministic synthetic parameters (shapes implied by the module)."""
    window_length = T // max_num_periods + 1
    k = jax.random.split(key, 6)
    p_idx = jnp.arange(1, max_num_periods + 1, dtype=jnp.float32)
    omega = 2.0 * jnp.pi * p_idx / float(window_length)      # SIREN frequencies
    phase = jax.random.uniform(k[0], (max_num_periods,), jnp.float32,
                               -jnp.pi, jnp.pi)
    aggw = jax.random.normal(k[1], (max_num_periods,), jnp.float32) / max_num_periods
    aggb = jax.random.normal(k[2], (1,), jnp.float32) * 0.01
    wnet = (jax.random.normal(k[3], (out_channels, input_channels), jnp.float32)
            / jnp.sqrt(float(input_channels)))
    bnet = jnp.zeros((out_channels,), jnp.float32)
    w3 = (jax.random.normal(k[4], (out_channels, input_channels), jnp.float32)
          / jnp.sqrt(float(input_channels)))
    b3 = jax.random.normal(k[5], (out_channels,), jnp.float32) * 0.01
    return omega, phase, aggw, aggb, wnet, bnet, w3, b3


def residual_block_reference(x, params):
    """Pure-JAX reference for correctness checking (full f32 precision)."""
    omega, phase, aggw, aggb, wnet, bnet, w3, b3 = params
    xf = x.astype(jnp.float32)
    hi = jax.lax.Precision.HIGHEST
    s = jnp.sin(omega[None, None, :, None] * xf[:, :, None, :]
                + phase[None, None, :, None])                         # (B,C,P,T)
    n = jnp.einsum('oc,bcpt->bopt', wnet, s, precision=hi) \
        + bnet[None, :, None, None]
    y = jnp.einsum('p,bopt->bot', aggw, n, precision=hi) + aggb[0]    # Aggregator
    r = jnp.einsum('oc,bct->bot', w3, xf, precision=hi) + b3[None, :, None]
    return r + y


if __name__ == "__main__":
    # Small shapes consistent with the module (defaults scaled down):
    # T=256, input_channels=8, max_num_periods=8, out_channels=16, batch=2.
    B, C, T = 2, 8, 256
    P, O = 8, 16

    key = jax.random.PRNGKey(0)
    kx, kp = jax.random.split(key)
    x = jax.random.normal(kx, (B, C, T), jnp.float32)
    params = init_params(kp, T=T, input_channels=C,
                         max_num_periods=P, out_channels=O)
    ref = residual_block_reference(x, params)

    # 1) Strict f32 path (f32 sin, f32 merged matmul): exact functional check.
    out = jax.block_until_ready(residual_block(x, params, sin_dtype=jnp.float32))
    assert out.shape == (B, O, T), out.shape
    max_err = float(jnp.max(jnp.abs(out - ref)))
    assert jnp.allclose(out, ref, rtol=1e-3, atol=1e-3), max_err

    # 2) Performance path: device-default sin dtype (bf16 on v6e/v7x, where the
    #    MXU-argument + bf16-sin route kicks in), f32 x at HBM (C=8 would be
    #    sublane-padded in bf16), bf16 output (O=16 packs perfectly).
    try:
        fast = jax.block_until_ready(
            residual_block(x, params, out_dtype=jnp.bfloat16))
    except Exception:
        # Guard for toolchains lacking bf16-sin lowering: fall back to f32 sin
        # while keeping the merged-matmul structure and bf16 output.
        fast = jax.block_until_ready(
            residual_block(x, params, out_dtype=jnp.bfloat16,
                           sin_dtype=jnp.float32))
    assert fast.shape == (B, O, T) and fast.dtype == jnp.bfloat16
    fast_err = float(jnp.max(jnp.abs(fast.astype(jnp.float32) - ref)))
    assert fast_err < 1e-1, fast_err

    print("KERNEL_OK")
</pallas_src>

<mosaic_0001>
module attributes {stable_mosaic.version = 11 : i64} {
  func.func @_residual_block_kernel(%arg0: i32, %arg1: i32, %arg2: memref<1x8x256xf32, #tpu.memory_space<vmem>>, %arg3: memref<64x1xf32, #tpu.memory_space<vmem>>, %arg4: memref<64x1xf32, #tpu.memory_space<vmem>>, %arg5: memref<64x16xf32, #tpu.memory_space<vmem>>, %arg6: memref<16x80xf32, #tpu.memory_space<vmem>>, %arg7: memref<1x16x256xf32, #tpu.memory_space<vmem>>, %arg8: memref<80x256xf32, #tpu.memory_space<vmem>>) attributes {dimension_semantics = [#tpu.dimension_semantics<parallel>, #tpu.dimension_semantics<parallel>], iteration_bounds = array<i64: 2, 1>, scalar_prefetch = 0 : i64, scratch_operands = 1 : i64, tpu.core_type = #tpu.core_type<tc>, window_params = [{transform_indices = @transform_0, window_bounds = array<i64: 1, 8, 256>}, {pipeline_mode = #tpu.pipeline_mode<synchronous>, transform_indices = @transform_1, window_bounds = array<i64: 64, 1>}, {pipeline_mode = #tpu.pipeline_mode<synchronous>, transform_indices = @transform_2, window_bounds = array<i64: 64, 1>}, {pipeline_mode = #tpu.pipeline_mode<synchronous>, transform_indices = @transform_3, window_bounds = array<i64: 64, 16>}, {pipeline_mode = #tpu.pipeline_mode<synchronous>, transform_indices = @transform_4, window_bounds = array<i64: 16, 80>}, {transform_indices = @transform_5, window_bounds = array<i64: 1, 16, 256>}]} {
    %c0 = arith.constant 0 : index
    %c0_0 = arith.constant 0 : index
    %c0_1 = arith.constant 0 : index
    %0 = vector.load %arg2[%c0, %c0_0, %c0_1] : memref<1x8x256xf32, #tpu.memory_space<vmem>>, vector<1x8x256xf32>
    %1 = vector.shape_cast %0 : vector<1x8x256xf32> to vector<8x256xf32>
    %cst = arith.constant 1.000000e+00 : f32
    %2 = vector.broadcast %cst : f32 to vector<1x256xf32>
    %cst_2 = arith.constant 0.000000e+00 : f32
    %3 = vector.broadcast %cst_2 : f32 to vector<7x256xf32>
    %4 = tpu.concatenate %1, %2, %3 in 0 : vector<8x256xf32>, vector<1x256xf32>, vector<7x256xf32> -> vector<16x256xf32>
    %5 = tpu.concatenate %1, %1, %1, %1, %1, %1, %1, %1 in 0 : vector<8x256xf32>, vector<8x256xf32>, vector<8x256xf32>, vector<8x256xf32>, vector<8x256xf32>, vector<8x256xf32>, vector<8x256xf32>, vector<8x256xf32> -> vector<64x256xf32>
    %c0_3 = arith.constant 0 : index
    %c0_4 = arith.constant 0 : index
    %6 = vector.load %arg3[%c0_3, %c0_4] : memref<64x1xf32, #tpu.memory_space<vmem>>, vector<64x1xf32>
    %7 = vector.broadcast %6 : vector<64x1xf32> to vector<64x256xf32>
    %8 = arith.mulf %7, %5 : vector<64x256xf32>
    %c0_5 = arith.constant 0 : index
    %c0_6 = arith.constant 0 : index
    %9 = vector.load %arg4[%c0_5, %c0_6] : memref<64x1xf32, #tpu.memory_space<vmem>>, vector<64x1xf32>
    %10 = vector.broadcast %9 : vector<64x1xf32> to vector<64x256xf32>
    %11 = arith.addf %8, %10 : vector<64x256xf32>
    %12 = math.sin %11 : vector<64x256xf32>
    %c0_7 = arith.constant 0 : index
    %c0_8 = arith.constant 0 : index
    %13 = vector.load %arg8[%c0_7, %c0_8] : memref<80x256xf32, #tpu.memory_space<vmem>>, vector<64x256xf32>
    tpu.vector_store %arg8[%c0_7, %c0_8], %12 {strides = array<i32>} : memref<80x256xf32, #tpu.memory_space<vmem>>, vector<64x256xf32>,
    %c64 = arith.constant 64 : index
    %c0_9 = arith.constant 0 : index
    %14 = vector.load %arg8[%c64, %c0_9] : memref<80x256xf32, #tpu.memory_space<vmem>>, vector<16x256xf32>
    tpu.vector_store %arg8[%c64, %c0_9], %4 {strides = array<i32>} : memref<80x256xf32, #tpu.memory_space<vmem>>, vector<16x256xf32>,
    %c0_10 = arith.constant 0 : index
    %c0_11 = arith.constant 0 : index
    %15 = vector.load %arg6[%c0_10, %c0_11] : memref<16x80xf32, #tpu.memory_space<vmem>>, vector<16x80xf32>
    %c0_12 = arith.constant 0 : index
    %c0_13 = arith.constant 0 : index
    %16 = vector.load %arg8[%c0_12, %c0_13] : memref<80x256xf32, #tpu.memory_space<vmem>>, vector<80x256xf32>
    %cst_14 = arith.constant dense<0.000000e+00> : vector<16x256xf32>
    %17 = tpu.matmul %15, %16, %cst_14 {dimension_numbers = #tpu.dot_dimension_numbers<[1], [0], [0], [1], [0, 0, 1, 1], [], []>} : vector<16x80xf32>, vector<80x256xf32>, vector<16x256xf32> -> vector<16x256xf32>
    %c0_15 = arith.constant 0 : index
    %c0_16 = arith.constant 0 : index
    %c0_17 = arith.constant 0 : index
    %18 = vector.load %arg7[%c0_15, %c0_16, %c0_17] : memref<1x16x256xf32, #tpu.memory_space<vmem>>, vector<1x16x256xf32>
    %19 = vector.shape_cast %18 : vector<1x16x256xf32> to vector<16x256xf32>
    %20 = vector.shape_cast %17 : vector<16x256xf32> to vector<1x16x256xf32>
    tpu.vector_store %arg7[%c0_15, %c0_16, %c0_17], %20 {strides = array<i32>} : memref<1x16x256xf32, #tpu.memory_space<vmem>>, vector<1x16x256xf32>,
    return
  }
  func.func @transform_0(%arg0: i32, %arg1: i32) -> (i32, i32, i32) {
    %c0_i32 = arith.constant 0 : i32
    %c0_i32_0 = arith.constant 0 : i32
    return %arg0, %c0_i32, %arg1 : i32, i32, i32
  }
  func.func @transform_1(%arg0: i32, %arg1: i32) -> (i32, i32) {
    %c0_i32 = arith.constant 0 : i32
    %c0_i32_0 = arith.constant 0 : i32
    %c0_i32_1 = arith.constant 0 : i32
    return %c0_i32, %c0_i32_0 : i32, i32
  }
  func.func @transform_2(%arg0: i32, %arg1: i32) -> (i32, i32) {
    %c0_i32 = arith.constant 0 : i32
    %c0_i32_0 = arith.constant 0 : i32
    %c0_i32_1 = arith.constant 0 : i32
    return %c0_i32, %c0_i32_0 : i32, i32
  }
  func.func @transform_3(%arg0: i32, %arg1: i32) -> (i32, i32) {
    %c0_i32 = arith.constant 0 : i32
    %c0_i32_0 = arith.constant 0 : i32
    %c0_i32_1 = arith.constant 0 : i32
    return %c0_i32, %c0_i32_0 : i32, i32
  }
  func.func @transform_4(%arg0: i32, %arg1: i32) -> (i32, i32) {
    %c0_i32 = arith.constant 0 : i32
    %c0_i32_0 = arith.constant 0 : i32
    %c0_i32_1 = arith.constant 0 : i32
    return %c0_i32, %c0_i32_0 : i32, i32
  }
  func.func @transform_5(%arg0: i32, %arg1: i32) -> (i32, i32, i32) {
    %c0_i32 = arith.constant 0 : i32
    %c0_i32_0 = arith.constant 0 : i32
    return %arg0, %c0_i32, %arg1 : i32, i32, i32
  }
}

</mosaic_0001>

<llo_original>
// kernel: tpu_custom_call.1
$region0: #{tpu_custom_call.1}
  #allocation0 [shape = 'u32[]', space=smem, size = 0x4, offset = 0x4, fixed_abs, tag = 'smem constant byte address 0x4 - core index']
  #allocation1 [shape = 'u32[144,128]{1,0:T(1,128)}', space=vmem, size = 0x12000, scoped, tag = 'internal scratch']
  #allocation2 [shape = 'f32[80,256]{1,0:T(8,128)}', space=vmem, size = 0x14000, scoped, tag = 'scratch operand']
  %s0 = inlined_call_operand.vmem [shape: f32[2,8,256], index: 0, kind: input, shape index: {}]
  %s1 = inlined_call_operand.vmem [shape: f32[64,1], index: 1, kind: input, shape index: {}]
  %s2 = inlined_call_operand.vmem [shape: f32[64,1], index: 2, kind: input, shape index: {}]
  %s3 = inlined_call_operand.vmem [shape: f32[64,16], index: 3, kind: input, shape index: {}]
  %s4 = inlined_call_operand.vmem [shape: f32[16,80], index: 4, kind: input, shape index: {}]
  %s5 = inlined_call_operand.hbm [shape: f32[2,16,256], index: 5, kind: output, shape index: {}]
  %s6 = sld [smem:[#allocation0]]
  $region53: #{tpu_custom_call.1} parent=0
    _
  %s8 = ssub.s32 1, %s6
  %s9 = scalar_select 0, %s8, %s6
  $region1: #{tpu_custom_call.1} parent=0
    #allocation3 [shape = 'u8[32768]{0}', space=vmem, size = 0x8000, scoped, tag = 'output window, operand 0']
    #allocation4 [shape = 's32[2]{0}', space=sflag, size = 0x8, scoped, tag = 'scoped memory for tpu_custom_call.1']
    %10 = vsyncpa [#allocation4], 0
    %s11 = scalar_lea.sflag [#allocation4], 1
    %12 = vsyncpa %s11, 0
    loop: start=0, step=1, limit=4
    $region2: #{tpu_custom_call.1} parent=1 // loop_pre_header
      _
    $region3: #{tpu_custom_call.1} parent=1 // loop_header
      %s14 = sphi 0, %s18
      %p15 = scmp.ge.s32.totalorder %s14, 4
      %s21 = sphi 0, %s33
      %s22 = sphi 0, %s29
      %s23 = sphi 0, %s21
      %s24 = sphi 0, %s22
      %s25 = sphi 0, %s23
      %s26 = sphi 0, %s24
      %s38 = sphi 0, %s40
      %s41 = sphi 0, %s38
      %s42 = sphi 0, %s41
      %s58 = sphi 0, %s42
      %s62 = sphi 0, %s62
      %s64 = sphi 0, %s62
      %s65 = sphi 0, %s64
      %s79 = sphi 0, %s65
      %s83 = sphi 0, %s83
      %s85 = sphi 0, %s83
      %s86 = sphi 0, %s85
      %s100 = sphi 0, %s86
      %s104 = sphi 0, %s104
      %s106 = sphi 0, %s104
      %s107 = sphi 0, %s106
      %s121 = sphi 0, %s107
      %s125 = sphi 0, %s125
      %s127 = sphi 0, %s125
      %s128 = sphi 0, %s127
      %s142 = sphi 0, %s128
      %s150 = sphi 0, %s152
      %s153 = sphi 0, %s150
      %s154 = sphi 0, %s153
      %s170 = sphi 0, %s154
    $region4: #{tpu_custom_call.1} parent=1 // loop_header_branch
      %17 = sbr.rel (%p15) target = $region8
    $region5: #{tpu_custom_call.1} parent=1 // loop_body
      %s19 = ssub.s32 %s14, 1
      %s20 = ssub.s32 %s14, 2
      %s27 = sadd.s32 1, %s22
      %p28 = scmp.ge.s32.totalorder %s27, 1
      %s29 = scalar_select %p28, 0, %s27
      %s30 = sadd.s32 1, %s21
      %s31 = scalar_select %p28, %s30, %s21
      %p32 = scmp.ge.s32.totalorder %s31, 2
      %s33 = scalar_select %p32, 0, %s31
      %s34 = ssub.s32 %s21, %s33
      %s35 = ssub.s32 %s22, %s29
      %s36 = sor.u32 %s34, %s35
      %p37 = scmp.eq.s32.totalorder %s36, 0
      %s39 = sadd.s32 %s38, 1
      %s40 = scalar_select %p37, %s38, %s39
      %p43 = pneg %p37
      %p44 = scmp.eq.s32.totalorder %s14, 1
      %p45 = por %p43, %p44
      %p46 = scmp.ne.s32.totalorder %s38, %s41
      %p47 = scmp.eq.s32.totalorder %s14, 0
      %p48 = por %p46, %p47
      %p49 = scmp.ne.s32.totalorder %s38, %s41
      %p50 = scmp.eq.s32.totalorder %s19, 1
      %p51 = por %p49, %p50
      %p52 = scmp.ne.s32.totalorder %s41, %s42
      %p53 = scmp.eq.s32.totalorder %s19, 0
      %p54 = por %p52, %p53
      %p55 = scmp.ne.s32.totalorder %s41, %s42
      %p56 = scmp.eq.s32.totalorder %s20, 1
      %p57 = por %p55, %p56
      %p59 = scmp.ne.s32.totalorder %s42, %s58
      %p60 = scmp.eq.s32.totalorder %s20, 0
      %p61 = por %p59, %p60
      %s63 = sadd.s32 %s62, 1
      %p66 = scmp.eq.s32.totalorder %s14, 1
      %p67 = scmp.ne.s32.totalorder %s62, %s64
      %p68 = scmp.eq.s32.totalorder %s14, 0
      %p69 = por %p67, %p68
      %p70 = scmp.ne.s32.totalorder %s62, %s64
      %p71 = scmp.eq.s32.totalorder %s19, 1
      %p72 = por %p70, %p71
      %p73 = scmp.ne.s32.totalorder %s64, %s65
      %p74 = scmp.eq.s32.totalorder %s19, 0
      %p75 = por %p73, %p74
      %p76 = scmp.ne.s32.totalorder %s64, %s65
      %p77 = scmp.eq.s32.totalorder %s20, 1
      %p78 = por %p76, %p77
      %p80 = scmp.ne.s32.totalorder %s65, %s79
      %p81 = scmp.eq.s32.totalorder %s20, 0
      %p82 = por %p80, %p81
      %s84 = sadd.s32 %s83, 1
      %p87 = scmp.eq.s32.totalorder %s14, 1
      %p88 = scmp.ne.s32.totalorder %s83, %s85
      %p89 = scmp.eq.s32.totalorder %s14, 0
      %p90 = por %p88, %p89
      %p91 = scmp.ne.s32.totalorder %s83, %s85
      %p92 = scmp.eq.s32.totalorder %s19, 1
      %p93 = por %p91, %p92
      %p94 = scmp.ne.s32.totalorder %s85, %s86
      %p95 = scmp.eq.s32.totalorder %s19, 0
      %p96 = por %p94, %p95
      %p97 = scmp.ne.s32.totalorder %s85, %s86
      %p98 = scmp.eq.s32.totalorder %s20, 1
      %p99 = por %p97, %p98
      %p101 = scmp.ne.s32.totalorder %s86, %s100
      %p102 = scmp.eq.s32.totalorder %s20, 0
      %p103 = por %p101, %p102
      %s105 = sadd.s32 %s104, 1
      %p108 = scmp.eq.s32.totalorder %s14, 1
      %p109 = scmp.ne.s32.totalorder %s104, %s106
      %p110 = scmp.eq.s32.totalorder %s14, 0
      %p111 = por %p109, %p110
      %p112 = scmp.ne.s32.totalorder %s104, %s106
      %p113 = scmp.eq.s32.totalorder %s19, 1
      %p114 = por %p112, %p113
      %p115 = scmp.ne.s32.totalorder %s106, %s107
      %p116 = scmp.eq.s32.totalorder %s19, 0
      %p117 = por %p115, %p116
      %p118 = scmp.ne.s32.totalorder %s106, %s107
      %p119 = scmp.eq.s32.totalorder %s20, 1
      %p120 = por %p118, %p119
      %p122 = scmp.ne.s32.totalorder %s107, %s121
      %p123 = scmp.eq.s32.totalorder %s20, 0
      %p124 = por %p122, %p123
      %s126 = sadd.s32 %s125, 1
      %p129 = scmp.eq.s32.totalorder %s14, 1
      %p130 = scmp.ne.s32.totalorder %s125, %s127
      %p131 = scmp.eq.s32.totalorder %s14, 0
      %p132 = por %p130, %p131
      %p133 = scmp.ne.s32.totalorder %s125, %s127
      %p134 = scmp.eq.s32.totalorder %s19, 1
      %p135 = por %p133, %p134
      %p136 = scmp.ne.s32.totalorder %s127, %s128
      %p137 = scmp.eq.s32.totalorder %s19, 0
      %p138 = por %p136, %p137
      %p139 = scmp.ne.s32.totalorder %s127, %s128
      %p140 = scmp.eq.s32.totalorder %s20, 1
      %p141 = por %p139, %p140
      %p143 = scmp.ne.s32.totalorder %s128, %s142
      %p144 = scmp.eq.s32.totalorder %s20, 0
      %p145 = por %p143, %p144
      %s146 = ssub.s32 %s21, %s33
      %s147 = ssub.s32 %s22, %s29
      %s148 = sor.u32 %s146, %s147
      %p149 = scmp.eq.s32.totalorder %s148, 0
      %s151 = sadd.s32 %s150, 1
      %s152 = scalar_select %p149, %s150, %s151
      %p155 = pneg %p149
      %p156 = scmp.eq.s32.totalorder %s14, 1
      %p157 = por %p155, %p156
      %p158 = scmp.ne.s32.totalorder %s150, %s153
      %p159 = scmp.eq.s32.totalorder %s14, 0
      %p160 = por %p158, %p159
      %p161 = scmp.ne.s32.totalorder %s150, %s153
      %p162 = scmp.eq.s32.totalorder %s19, 1
      %p163 = por %p161, %p162
      %p164 = scmp.ne.s32.totalorder %s153, %s154
      %p165 = scmp.eq.s32.totalorder %s19, 0
      %p166 = por %p164, %p165
      %p167 = scmp.ne.s32.totalorder %s153, %s154
      %p168 = scmp.eq.s32.totalorder %s20, 1
      %p169 = por %p167, %p168
      %p171 = scmp.ne.s32.totalorder %s154, %s170
      %p172 = scmp.eq.s32.totalorder %s20, 0
      %p173 = por %p171, %p172
      %p174 = scmp.le.s32.totalorder 1, %s14
      %p175 = scmp.lt.s32.totalorder %s14, 3
      %p176 = pnand %p174, %p175
      %p177 = pneg %p176
      // Predicated region
      $region9: #{tpu_custom_call.1} parent=5 // pred_check
        _
      $region10: #{tpu_custom_call.1} parent=5 // pred_check_branch
        %179 = sbr.rel (%p176) target = $region12
      $region11: #{tpu_custom_call.1} parent=5 // pred_region
        %s180 = ssub.s32 %s14, 1
        // Predicated region
        $region13: #{tpu_custom_call.1} parent=11 // pred_check
          %p181 = pneg %p75
        $region14: #{tpu_custom_call.1} parent=11 // pred_check_branch
          %183 = sbr.rel (%p181) target = $region16
        $region15: #{tpu_custom_call.1} parent=11 // pred_region
          _
        $region16: #{tpu_custom_call.1} parent=11 // pred_fallthru
          _
        // Predicated region
        $region17: #{tpu_custom_call.1} parent=11 // pred_check
          %p184 = pneg %p96
        $region18: #{tpu_custom_call.1} parent=11 // pred_check_branch
          %186 = sbr.rel (%p184) target = $region20
        $region19: #{tpu_custom_call.1} parent=11 // pred_region
          _
        $region20: #{tpu_custom_call.1} parent=11 // pred_fallthru
          _
        // Predicated region
        $region21: #{tpu_custom_call.1} parent=11 // pred_check
          %p187 = pneg %p117
        $region22: #{tpu_custom_call.1} parent=11 // pred_check_branch
          %189 = sbr.rel (%p187) target = $region24
        $region23: #{tpu_custom_call.1} parent=11 // pred_region
          _
        $region24: #{tpu_custom_call.1} parent=11 // pred_fallthru
          _
        // Predicated region
        $region25: #{tpu_custom_call.1} parent=11 // pred_check
          %p190 = pneg %p138
        $region26: #{tpu_custom_call.1} parent=11 // pred_check_branch
          %192 = sbr.rel (%p190) target = $region28
        $region27: #{tpu_custom_call.1} parent=11 // pred_region
          _
        $region28: #{tpu_custom_call.1} parent=11 // pred_fallthru
          _
      $region12: #{tpu_custom_call.1} parent=5 // pred_fallthru
        _
      %p193 = scmp.lt.s32.totalorder %s14, 2
      // Predicated region
      $region29: #{tpu_custom_call.1} parent=5 // pred_check
        %p194 = pneg %p193
      $region30: #{tpu_custom_call.1} parent=5 // pred_check_branch
        %196 = sbr.rel (%p194) target = $region32
      $region31: #{tpu_custom_call.1} parent=5 // pred_region
        // Predicated region
        $region33: #{tpu_custom_call.1} parent=31 // pred_check
          %p197 = pneg %p48
        $region34: #{tpu_custom_call.1} parent=31 // pred_check_branch
          %199 = sbr.rel (%p197) target = $region36
        $region35: #{tpu_custom_call.1} parent=31 // pred_region
          %s200 = smul.u32 2, %s22
          %p201 = scmp.lt.s32.totalorder %s21, 1
          %s202 = scalar_select %p201, %s21, 1
          %p203 = scmp.lt.s32.totalorder %s200, 1
          %s204 = scalar_select %p203, %s200, 1
          %s205 = smul.addr %s202, 2
          %s206 = sadd.s32 %s204, %s205
          %s207 = smul.addr %s206, 8
          %s208 = scalar_lea.vmem %s0, %s207
          %s209 = smul.u32 2, %s22
        $region36: #{tpu_custom_call.1} parent=31 // pred_fallthru
          _
      $region32: #{tpu_custom_call.1} parent=5 // pred_fallthru
        _
      %p210 = scmp.le.s32.totalorder 1, %s14
      %p211 = scmp.lt.s32.totalorder %s14, 3
      %p212 = pnand %p210, %p211
      %p213 = pneg %p212
      // Predicated region
      $region37: #{tpu_custom_call.1} parent=5 // pred_check
        _
      $region38: #{tpu_custom_call.1} parent=5 // pred_check_branch
        %215 = sbr.rel (%p212) target = $region40
      $region39: #{tpu_custom_call.1} parent=5 // pred_region
        %s216 = ssub.s32 %s14, 1
        %s217 = smul.u32 2, %s24
        %p218 = scmp.lt.s32.totalorder %s23, 1
        %s219 = scalar_select %p218, %s23, 1
        %p220 = scmp.lt.s32.totalorder %s217, 1
        %s221 = scalar_select %p220, %s217, 1
        %s222 = smul.addr %s219, 2
        %s223 = sadd.s32 %s221, %s222
        %s224 = smul.addr %s223, 8
        %s225 = scalar_lea.vmem %s0, %s224
        %p226 = pneg %p54
        %p227 = pneg %p51
        %p228 = pneg %p75
        %p229 = pneg %p72
        %p230 = pneg %p96
        %p231 = pneg %p93
        %p232 = pneg %p117
        %p233 = pneg %p114
        %p234 = pneg %p138
        %p235 = pneg %p135
        %p236 = pneg %p166
        %p237 = pneg %p163
        %s238 = sand.u32 %s153, 1
        %s239 = scalar_lea.sflag [#allocation4], %s238
        %s240 = sand.u32 %s153, 1
        %s241 = smul.addr %s240, 32
        %s242 = scalar_lea.vmem [#allocation3], %s241
        %s243 = smul.u32 2, %s24
        %p244 = scmp.lt.s32.totalorder %s23, 1
        %s245 = scalar_select %p244, %s23, 1
        %p246 = scmp.lt.s32.totalorder %s243, 1
        %s247 = scalar_select %p246, %s243, 1
        %s248 = smul.addr %s245, 2
        %s249 = sadd.s32 %s247, %s248
        %s250 = smul.addr %s249, 8
        %s251 = scalar_lea.vmem %s0, %s250
        %s252 = smul.u32 2, %s24
        %s253 = smul.u32 2, %s24
        %v254 = vld [vmem:[%s251] sm:$0xff]
        %v255 = vld [vmem:[%s251 + $0x8] sm:$0xff]
        %vm256 = vcmask 1040384
        %v257 = vsel %vm256, 1.0, 0.0
        %v258 = vld [vmem:[%s1] sm:$0xff]
        %v259 = vld [vmem:[%s1 + $0x8] sm:$0xff]
        %v260 = vld [vmem:[%s1 + $0x10] sm:$0xff]
        %v261 = vld [vmem:[%s1 + $0x18] sm:$0xff]
        %v262 = vld [vmem:[%s1 + $0x20] sm:$0xff]
        %v263 = vld [vmem:[%s1 + $0x28] sm:$0xff]
        %v264 = vld [vmem:[%s1 + $0x30] sm:$0xff]
        %v265 = vld [vmem:[%s1 + $0x38] sm:$0xff]
        %267 = vset.pattern.permute.xlu0 0
        %268 = vperm.xlu0 %267, %v258
        %v269 = vpop.permute.xlu0 %268
        %272 = vset.pattern.permute.xlu0 0
        %273 = vperm.xlu0 %272, %v259
        %v274 = vpop.permute.xlu0 %273
        %277 = vset.pattern.permute.xlu0 0
        %278 = vperm.xlu0 %277, %v260
        %v279 = vpop.permute.xlu0 %278
        %282 = vset.pattern.permute.xlu0 0
        %283 = vperm.xlu0 %282, %v261
        %v284 = vpop.permute.xlu0 %283
        %287 = vset.pattern.permute.xlu0 0
        %288 = vperm.xlu0 %287, %v262
        %v289 = vpop.permute.xlu0 %288
        %292 = vset.pattern.permute.xlu0 0
        %293 = vperm.xlu0 %292, %v263
        %v294 = vpop.permute.xlu0 %293
        %297 = vset.pattern.permute.xlu0 0
        %298 = vperm.xlu0 %297, %v264
        %v299 = vpop.permute.xlu0 %298
        %302 = vset.pattern.permute.xlu0 0
        %303 = vperm.xlu0 %302, %v265
        %v304 = vpop.permute.xlu0 %303
        %v306 = vmul.f32 %v269, %v254
        %v307 = vmul.f32 %v269, %v255
        %v308 = vmul.f32 %v274, %v254
        %v309 = vmul.f32 %v274, %v255
        %v310 = vmul.f32 %v279, %v254
        %v311 = vmul.f32 %v279, %v255
        %v312 = vmul.f32 %v284, %v254
        %v313 = vmul.f32 %v284, %v255
        %v314 = vmul.f32 %v289, %v254
        %v315 = vmul.f32 %v289, %v255
        %v316 = vmul.f32 %v294, %v254
        %v317 = vmul.f32 %v294, %v255
        %v318 = vmul.f32 %v299, %v254
        %v319 = vmul.f32 %v299, %v255
        %v320 = vmul.f32 %v304, %v254
        %v321 = vmul.f32 %v304, %v255
        %v322 = vld [vmem:[%s2] sm:$0xff]
        %v323 = vld [vmem:[%s2 + $0x8] sm:$0xff]
        %v324 = vld [vmem:[%s2 + $0x10] sm:$0xff]
        %v325 = vld [vmem:[%s2 + $0x18] sm:$0xff]
        %v326 = vld [vmem:[%s2 + $0x20] sm:$0xff]
        %v327 = vld [vmem:[%s2 + $0x28] sm:$0xff]
        %v328 = vld [vmem:[%s2 + $0x30] sm:$0xff]
        %v329 = vld [vmem:[%s2 + $0x38] sm:$0xff]
        %331 = vset.pattern.permute.xlu0 0
        %332 = vperm.xlu0 %331, %v322
        %v333 = vpop.permute.xlu0 %332
        %336 = vset.pattern.permute.xlu0 0
        %337 = vperm.xlu0 %336, %v323
        %v338 = vpop.permute.xlu0 %337
        %341 = vset.pattern.permute.xlu0 0
        %342 = vperm.xlu0 %341, %v324
        %v343 = vpop.permute.xlu0 %342
        %346 = vset.pattern.permute.xlu0 0
        %347 = vperm.xlu0 %346, %v325
        %v348 = vpop.permute.xlu0 %347
        %351 = vset.pattern.permute.xlu0 0
        %352 = vperm.xlu0 %351, %v326
        %v353 = vpop.permute.xlu0 %352
        %356 = vset.pattern.permute.xlu0 0
        %357 = vperm.xlu0 %356, %v327
        %v358 = vpop.permute.xlu0 %357
        %361 = vset.pattern.permute.xlu0 0
        %362 = vperm.xlu0 %361, %v328
        %v363 = vpop.permute.xlu0 %362
        %366 = vset.pattern.permute.xlu0 0
        %367 = vperm.xlu0 %366, %v329
        %v368 = vpop.permute.xlu0 %367
        %v370 = vadd.f32 %v306, %v333
        %v371 = vadd.f32 %v307, %v333
        %v372 = vadd.f32 %v308, %v338
        %v373 = vadd.f32 %v309, %v338
        %v374 = vadd.f32 %v310, %v343
        %v375 = vadd.f32 %v311, %v343
        %v376 = vadd.f32 %v312, %v348
        %v377 = vadd.f32 %v313, %v348
        %v378 = vadd.f32 %v314, %v353
        %v379 = vadd.f32 %v315, %v353
        %v380 = vadd.f32 %v316, %v358
        %v381 = vadd.f32 %v317, %v358
        %v382 = vadd.f32 %v318, %v363
        %v383 = vadd.f32 %v319, %v363
        %v384 = vadd.f32 %v320, %v368
        %v385 = vadd.f32 %v321, %v368
        %v386 = vand.u32 2147483647, %v370
        %vm387 = vcmp.le.f32.partialorder %v386, 0.7853982
        %vm388 = vcmp.lt.s32.totalorder %v370, 0
        %v389 = vand.u32 %v370, 2139095040
        %v390 = vshrl.u32 %v389, 23
        %v391 = vsub.s32 %v390, 127
        %v392 = vand.u32 2147483647, %v370
        %v393 = vand.u32 %v392, 8388607
        %v394 = vor.u32 %v393, 8388608
        %v395 = vsub.s32 0, %v394
        %v396 = vadd.s32 %v391, 1
        %vm397 = vcmp.gt.s32.totalorder %v396, 0
        %v398 = vsel %vm397, %v396, 0
        %v399 = vshrl.u32 %v398, 5
        %v400 = vand.u32 %v398, 31
        %v401 = vsub.s32 32, %v400
        %v402 = vshrl.u32 683565275, %v401
        %v403 = vshll.u32 683565275, %v400
        %v404 = vshrl.u32 2475754826, %v401
        %v405 = vor.u32 %v403, %v404
        %v406 = vshll.u32 2475754826, %v400
        %v407 = vshrl.u32 2131351028, %v401
        %v408 = vor.u32 %v406, %v407
        %v409 = vshll.u32 2131351028, %v400
        %v410 = vshrl.u32 2102212464, %v401
        %v411 = vor.u32 %v409, %v410
        %v412 = vshll.u32 2102212464, %v400
        %v413 = vshrl.u32 920167782, %v401
        %v414 = vor.u32 %v412, %v413
        %v415 = vshll.u32 920167782, %v400
        %v416 = vshrl.u32 1326507024, %v401
        %v417 = vor.u32 %v415, %v416
        %vm418 = vcmp.lt.s32.totalorder %v399, 1
        %vm419 = vcmp.lt.s32.totalorder %v399, 2
        %vm420 = vcmp.lt.s32.totalorder %v399, 3
        %vm421 = vcmp.lt.s32.totalorder %v399, 4
        %v422 = vsel %vm418, %v402, %v405
        %v423 = vsel %vm421, %v411, 2102212464
        %v424 = vsel %vm420, %v408, %v423
        %v425 = vsel %vm419, %v422, %v424
        %v426 = vsel %vm418, %v405, %v408
        %v427 = vsel %vm421, %v414, 920167782
        %v428 = vsel %vm420, %v411, %v427
        %v429 = vsel %vm419, %v426, %v428
        %v430 = vsel %vm418, %v408, %v411
        %v431 = vsel %vm421, %v417, 1326507024
        %v432 = vsel %vm420, %v414, %v431
        %v433 = vsel %vm419, %v430, %v432
        %v434 = vshll.u32 %v394, 8
        %v435 = vmul.u32.u64.compose %v434, %v433
        %v436 = vextract.low.u32 %v435
        %v437 = vextract.high.u32 %v435
        %v438 = vmul.u32.u64.compose %v434, %v429
        %v439 = vextract.low.u32 %v438
        %v440 = vextract.high.u32 %v438
        %v441 = vmul.u32 %v434, %v425
        %v442 = vadd.s32 %v437, %v439
        %vm443 = vc.u32 %v437, %v439
        %v444 = vadd.s32 %v440, 1
        %v445 = vsel %vm443, %v444, %v440
        %v446 = vadd.s32 %v441, %v445
        %v447 = vadd.s32 %v446, 536870912
        %v448 = vshrl.u32 %v447, 30
        %v449 = vshll.u32 %v448, 30
        %v450 = vsub.s32 %v446, %v449
        %vm451 = vcmp.lt.s32.totalorder %v450, 0
        %v452 = vsub.s32 0, %v450
        %v453 = vsel %vm451, %v452, %v450
        %v454 = vclz %v453
        %v455 = vsub.s32 %v454, 2
        %vm456 = vcmp.gt.s32.totalorder 0, %v455
        %v457 = vsel %vm456, 0, %v455
        %v458 = vsub.s32 32, %v457
        %v459 = vshll.u32 %v450, %v457
        %v460 = vshrl.u32 %v442, %v458
        %v461 = vor.u32 %v459, %v460
        %v462 = vsub.s32 4294967266, %v457
        %v463 = vadd.s32 %v462, 127
        %v464 = vshll.u32 %v463, 23
        %v465 = vor.u32 4788187, %v464
        %v466 = vand.u32 2147483647, %v465
        %v468 = vcvt.s32.f32 %v461
        %v469 = vmul.f32 %v468, %v466
        %v470 = vxor.u32 %v469, 2147483648
        %v471 = vsel %vm388, %v470, %v469
        %v472 = vsub.s32 4, %v448
        %v473 = vsel %vm388, %v472, %v448
        %v474 = vsel %vm387, %v370, %v471
        %v475 = vsel %vm387, 0, %v473
        %v476 = vcosq.f32.pop %v474
        %v477 = vsinq.f32.pop %v474
        %vm478 = vweird.f32 %v370
        %v479 = vadd.s32 %v475, 3
        %v480 = vand.u32 %v479, 3
        %vm481 = vcmp.lt.s32.totalorder %v480, 2
        %vm482 = vcmp.eq.s32.totalorder %v480, 0
        %v483 = vxor.u32 %v477, 2147483648
        %v484 = vsel %vm482, %v476, %v483
        %vm485 = vcmp.eq.s32.totalorder %v480, 2
        %v486 = vxor.u32 %v476, 2147483648
        %v487 = vsel %vm485, %v486, %v477
        %v488 = vsel %vm481, %v484, %v487
        %v489 = vsel %vm478, nan, %v488
        %v490 = vand.u32 2147483647, %v371
        %vm491 = vcmp.le.f32.partialorder %v490, 0.7853982
        %vm492 = vcmp.lt.s32.totalorder %v371, 0
        %v493 = vand.u32 %v371, 2139095040
        %v494 = vshrl.u32 %v493, 23
        %v495 = vsub.s32 %v494, 127
        %v496 = vand.u32 2147483647, %v371
        %v497 = vand.u32 %v496, 8388607
        %v498 = vor.u32 %v497, 8388608
        %v499 = vsub.s32 0, %v498
        %v500 = vadd.s32 %v495, 1
        %vm501 = vcmp.gt.s32.totalorder %v500, 0
        %v502 = vsel %vm501, %v500, 0
        %v503 = vshrl.u32 %v502, 5
        %v504 = vand.u32 %v502, 31
        %v505 = vsub.s32 32, %v504
        %v506 = vshrl.u32 683565275, %v505
        %v507 = vshll.u32 683565275, %v504
        %v508 = vshrl.u32 2475754826, %v505
        %v509 = vor.u32 %v507, %v508
        %v510 = vshll.u32 2475754826, %v504
        %v511 = vshrl.u32 2131351028, %v505
        %v512 = vor.u32 %v510, %v511
        %v513 = vshll.u32 2131351028, %v504
        %v514 = vshrl.u32 2102212464, %v505
        %v515 = vor.u32 %v513, %v514
        %v516 = vshll.u32 2102212464, %v504
        %v517 = vshrl.u32 920167782, %v505
        %v518 = vor.u32 %v516, %v517
        %v519 = vshll.u32 920167782, %v504
        %v520 = vshrl.u32 1326507024, %v505
        %v521 = vor.u32 %v519, %v520
        %vm522 = vcmp.lt.s32.totalorder %v503, 1
        %vm523 = vcmp.lt.s32.totalorder %v503, 2
        %vm524 = vcmp.lt.s32.totalorder %v503, 3
        %vm525 = vcmp.lt.s32.totalorder %v503, 4
        %v526 = vsel %vm522, %v506, %v509
        %v527 = vsel %vm525, %v515, 2102212464
        %v528 = vsel %vm524, %v512, %v527
        %v529 = vsel %vm523, %v526, %v528
        %v530 = vsel %vm522, %v509, %v512
        %v531 = vsel %vm525, %v518, 920167782
        %v532 = vsel %vm524, %v515, %v531
        %v533 = vsel %vm523, %v530, %v532
        %v534 = vsel %vm522, %v512, %v515
        %v535 = vsel %vm525, %v521, 1326507024
        %v536 = vsel %vm524, %v518, %v535
        %v537 = vsel %vm523, %v534, %v536
        %v538 = vshll.u32 %v498, 8
        %v539 = vmul.u32.u64.compose %v538, %v537
        %v540 = vextract.low.u32 %v539
        %v541 = vextract.high.u32 %v539
        %v542 = vmul.u32.u64.compose %v538, %v533
        %v543 = vextract.low.u32 %v542
        %v544 = vextract.high.u32 %v542
        %v545 = vmul.u32 %v538, %v529
        %v546 = vadd.s32 %v541, %v543
        %vm547 = vc.u32 %v541, %v543
        %v548 = vadd.s32 %v544, 1
        %v549 = vsel %vm547, %v548, %v544
        %v550 = vadd.s32 %v545, %v549
        %v551 = vadd.s32 %v550, 536870912
        %v552 = vshrl.u32 %v551, 30
        %v553 = vshll.u32 %v552, 30
        %v554 = vsub.s32 %v550, %v553
        %vm555 = vcmp.lt.s32.totalorder %v554, 0
        %v556 = vsub.s32 0, %v554
        %v557 = vsel %vm555, %v556, %v554
        %v558 = vclz %v557
        %v559 = vsub.s32 %v558, 2
        %vm560 = vcmp.gt.s32.totalorder 0, %v559
        %v561 = vsel %vm560, 0, %v559
        %v562 = vsub.s32 32, %v561
        %v563 = vshll.u32 %v554, %v561
        %v564 = vshrl.u32 %v546, %v562
        %v565 = vor.u32 %v563, %v564
        %v566 = vsub.s32 4294967266, %v561
        %v567 = vadd.s32 %v566, 127
        %v568 = vshll.u32 %v567, 23
        %v569 = vor.u32 4788187, %v568
        %v570 = vand.u32 2147483647, %v569
        %v572 = vcvt.s32.f32 %v565
        %v573 = vmul.f32 %v572, %v570
        %v574 = vxor.u32 %v573, 2147483648
        %v575 = vsel %vm492, %v574, %v573
        %v576 = vsub.s32 4, %v552
        %v577 = vsel %vm492, %v576, %v552
        %v578 = vsel %vm491, %v371, %v575
        %v579 = vsel %vm491, 0, %v577
        %v580 = vcosq.f32.pop %v578
        %v581 = vsinq.f32.pop %v578
        %vm582 = vweird.f32 %v371
        %v583 = vadd.s32 %v579, 3
        %v584 = vand.u32 %v583, 3
        %vm585 = vcmp.lt.s32.totalorder %v584, 2
        %vm586 = vcmp.eq.s32.totalorder %v584, 0
        %v587 = vxor.u32 %v581, 2147483648
        %v588 = vsel %vm586, %v580, %v587
        %vm589 = vcmp.eq.s32.totalorder %v584, 2
        %v590 = vxor.u32 %v580, 2147483648
        %v591 = vsel %vm589, %v590, %v581
        %v592 = vsel %vm585, %v588, %v591
        %v593 = vsel %vm582, nan, %v592
        %v594 = vand.u32 2147483647, %v372
        %vm595 = vcmp.le.f32.partialorder %v594, 0.7853982
        %vm596 = vcmp.lt.s32.totalorder %v372, 0
        %v597 = vand.u32 %v372, 2139095040
        %v598 = vshrl.u32 %v597, 23
        %v599 = vsub.s32 %v598, 127
        %v600 = vand.u32 2147483647, %v372
        %v601 = vand.u32 %v600, 8388607
        %v602 = vor.u32 %v601, 8388608
        %v603 = vsub.s32 0, %v602
        %v604 = vadd.s32 %v599, 1
        %vm605 = vcmp.gt.s32.totalorder %v604, 0
        %v606 = vsel %vm605, %v604, 0
        %v607 = vshrl.u32 %v606, 5
        %v608 = vand.u32 %v606, 31
        %v609 = vsub.s32 32, %v608
        %v610 = vshrl.u32 683565275, %v609
        %v611 = vshll.u32 683565275, %v608
        %v612 = vshrl.u32 2475754826, %v609
        %v613 = vor.u32 %v611, %v612
        %v614 = vshll.u32 2475754826, %v608
        %v615 = vshrl.u32 2131351028, %v609
        %v616 = vor.u32 %v614, %v615
        %v617 = vshll.u32 2131351028, %v608
        %v618 = vshrl.u32 2102212464, %v609
        %v619 = vor.u32 %v617, %v618
        %v620 = vshll.u32 2102212464, %v608
        %v621 = vshrl.u32 920167782, %v609
        %v622 = vor.u32 %v620, %v621
        %v623 = vshll.u32 920167782, %v608
        %v624 = vshrl.u32 1326507024, %v609
        %v625 = vor.u32 %v623, %v624
        %vm626 = vcmp.lt.s32.totalorder %v607, 1
        %vm627 = vcmp.lt.s32.totalorder %v607, 2
        %vm628 = vcmp.lt.s32.totalorder %v607, 3
        %vm629 = vcmp.lt.s32.totalorder %v607, 4
        %v630 = vsel %vm626, %v610, %v613
        %v631 = vsel %vm629, %v619, 2102212464
        %v632 = vsel %vm628, %v616, %v631
        %v633 = vsel %vm627, %v630, %v632
        %v634 = vsel %vm626, %v613, %v616
        %v635 = vsel %vm629, %v622, 920167782
        %v636 = vsel %vm628, %v619, %v635
        %v637 = vsel %vm627, %v634, %v636
        %v638 = vsel %vm626, %v616, %v619
        %v639 = vsel %vm629, %v625, 1326507024
        %v640 = vsel %vm628, %v622, %v639
        %v641 = vsel %vm627, %v638, %v640
        %v642 = vshll.u32 %v602, 8
        %v643 = vmul.u32.u64.compose %v642, %v641
        %v644 = vextract.low.u32 %v643
        %v645 = vextract.high.u32 %v643
        %v646 = vmul.u32.u64.compose %v642, %v637
        %v647 = vextract.low.u32 %v646
        %v648 = vextract.high.u32 %v646
        %v649 = vmul.u32 %v642, %v633
        %v650 = vadd.s32 %v645, %v647
        %vm651 = vc.u32 %v645, %v647
        %v652 = vadd.s32 %v648, 1
        %v653 = vsel %vm651, %v652, %v648
        %v654 = vadd.s32 %v649, %v653
        %v655 = vadd.s32 %v654, 536870912
        %v656 = vshrl.u32 %v655, 30
        %v657 = vshll.u32 %v656, 30
        %v658 = vsub.s32 %v654, %v657
        %vm659 = vcmp.lt.s32.totalorder %v658, 0
        %v660 = vsub.s32 0, %v658
        %v661 = vsel %vm659, %v660, %v658
        %v662 = vclz %v661
        %v663 = vsub.s32 %v662, 2
        %vm664 = vcmp.gt.s32.totalorder 0, %v663
        %v665 = vsel %vm664, 0, %v663
        %v666 = vsub.s32 32, %v665
        %v667 = vshll.u32 %v658, %v665
        %v668 = vshrl.u32 %v650, %v666
        %v669 = vor.u32 %v667, %v668
        %v670 = vsub.s32 4294967266, %v665
        %v671 = vadd.s32 %v670, 127
        %v672 = vshll.u32 %v671, 23
        %v673 = vor.u32 4788187, %v672
        %v674 = vand.u32 2147483647, %v673
        %v676 = vcvt.s32.f32 %v669
        %v677 = vmul.f32 %v676, %v674
        %v678 = vxor.u32 %v677, 2147483648
        %v679 = vsel %vm596, %v678, %v677
        %v680 = vsub.s32 4, %v656
        %v681 = vsel %vm596, %v680, %v656
        %v682 = vsel %vm595, %v372, %v679
        %v683 = vsel %vm595, 0, %v681
        %v684 = vcosq.f32.pop %v682
        %v685 = vsinq.f32.pop %v682
        %vm686 = vweird.f32 %v372
        %v687 = vadd.s32 %v683, 3
        %v688 = vand.u32 %v687, 3
        %vm689 = vcmp.lt.s32.totalorder %v688, 2
        %vm690 = vcmp.eq.s32.totalorder %v688, 0
        %v691 = vxor.u32 %v685, 2147483648
        %v692 = vsel %vm690, %v684, %v691
        %vm693 = vcmp.eq.s32.totalorder %v688, 2
        %v694 = vxor.u32 %v684, 2147483648
        %v695 = vsel %vm693, %v694, %v685
        %v696 = vsel %vm689, %v692, %v695
        %v697 = vsel %vm686, nan, %v696
        %v698 = vand.u32 2147483647, %v373
        %vm699 = vcmp.le.f32.partialorder %v698, 0.7853982
        %vm700 = vcmp.lt.s32.totalorder %v373, 0
        %v701 = vand.u32 %v373, 2139095040
        %v702 = vshrl.u32 %v701, 23
        %v703 = vsub.s32 %v702, 127
        %v704 = vand.u32 2147483647, %v373
        %v705 = vand.u32 %v704, 8388607
        %v706 = vor.u32 %v705, 8388608
        %v707 = vsub.s32 0, %v706
        %v708 = vadd.s32 %v703, 1
        %vm709 = vcmp.gt.s32.totalorder %v708, 0
        %v710 = vsel %vm709, %v708, 0
        %v711 = vshrl.u32 %v710, 5
        %v712 = vand.u32 %v710, 31
        %v713 = vsub.s32 32, %v712
        %v714 = vshrl.u32 683565275, %v713
        %v715 = vshll.u32 683565275, %v712
        %v716 = vshrl.u32 2475754826, %v713
        %v717 = vor.u32 %v715, %v716
        %v718 = vshll.u32 2475754826, %v712
        %v719 = vshrl.u32 2131351028, %v713
        %v720 = vor.u32 %v718, %v719
        %v721 = vshll.u32 2131351028, %v712
        %v722 = vshrl.u32 2102212464, %v713
        %v723 = vor.u32 %v721, %v722
        %v724 = vshll.u32 2102212464, %v712
        %v725 = vshrl.u32 920167782, %v713
        %v726 = vor.u32 %v724, %v725
        %v727 = vshll.u32 920167782, %v712
        %v728 = vshrl.u32 1326507024, %v713
        %v729 = vor.u32 %v727, %v728
        %vm730 = vcmp.lt.s32.totalorder %v711, 1
        %vm731 = vcmp.lt.s32.totalorder %v711, 2
        %vm732 = vcmp.lt.s32.totalorder %v711, 3
        %vm733 = vcmp.lt.s32.totalorder %v711, 4
        %v734 = vsel %vm730, %v714, %v717
        %v735 = vsel %vm733, %v723, 2102212464
        %v736 = vsel %vm732, %v720, %v735
        %v737 = vsel %vm731, %v734, %v736
        %v738 = vsel %vm730, %v717, %v720
        %v739 = vsel %vm733, %v726, 920167782
        %v740 = vsel %vm732, %v723, %v739
        %v741 = vsel %vm731, %v738, %v740
        %v742 = vsel %vm730, %v720, %v723
        %v743 = vsel %vm733, %v729, 1326507024
        %v744 = vsel %vm732, %v726, %v743
        %v745 = vsel %vm731, %v742, %v744
        %v746 = vshll.u32 %v706, 8
        %v747 = vmul.u32.u64.compose %v746, %v745
        %v748 = vextract.low.u32 %v747
        %v749 = vextract.high.u32 %v747
        %v750 = vmul.u32.u64.compose %v746, %v741
        %v751 = vextract.low.u32 %v750
        %v752 = vextract.high.u32 %v750
        %v753 = vmul.u32 %v746, %v737
        %v754 = vadd.s32 %v749, %v751
        %vm755 = vc.u32 %v749, %v751
        %v756 = vadd.s32 %v752, 1
        %v757 = vsel %vm755, %v756, %v752
        %v758 = vadd.s32 %v753, %v757
        %v759 = vadd.s32 %v758, 536870912
        %v760 = vshrl.u32 %v759, 30
        %v761 = vshll.u32 %v760, 30
        %v762 = vsub.s32 %v758, %v761
        %vm763 = vcmp.lt.s32.totalorder %v762, 0
        %v764 = vsub.s32 0, %v762
        %v765 = vsel %vm763, %v764, %v762
        %v766 = vclz %v765
        %v767 = vsub.s32 %v766, 2
        %vm768 = vcmp.gt.s32.totalorder 0, %v767
        %v769 = vsel %vm768, 0, %v767
        %v770 = vsub.s32 32, %v769
        %v771 = vshll.u32 %v762, %v769
        %v772 = vshrl.u32 %v754, %v770
        %v773 = vor.u32 %v771, %v772
        %v774 = vsub.s32 4294967266, %v769
        %v775 = vadd.s32 %v774, 127
        %v776 = vshll.u32 %v775, 23
        %v777 = vor.u32 4788187, %v776
        %v778 = vand.u32 2147483647, %v777
        %v780 = vcvt.s32.f32 %v773
        %v781 = vmul.f32 %v780, %v778
        %v782 = vxor.u32 %v781, 2147483648
        %v783 = vsel %vm700, %v782, %v781
        %v784 = vsub.s32 4, %v760
        %v785 = vsel %vm700, %v784, %v760
        %v786 = vsel %vm699, %v373, %v783
        %v787 = vsel %vm699, 0, %v785
        %v788 = vcosq.f32.pop %v786
        %v789 = vsinq.f32.pop %v786
        %vm790 = vweird.f32 %v373
        %v791 = vadd.s32 %v787, 3
        %v792 = vand.u32 %v791, 3
        %vm793 = vcmp.lt.s32.totalorder %v792, 2
        %vm794 = vcmp.eq.s32.totalorder %v792, 0
        %v795 = vxor.u32 %v789, 2147483648
        %v796 = vsel %vm794, %v788, %v795
        %vm797 = vcmp.eq.s32.totalorder %v792, 2
        %v798 = vxor.u32 %v788, 2147483648
        %v799 = vsel %vm797, %v798, %v789
        %v800 = vsel %vm793, %v796, %v799
        %v801 = vsel %vm790, nan, %v800
        %v802 = vand.u32 2147483647, %v374
        %vm803 = vcmp.le.f32.partialorder %v802, 0.7853982
        %vm804 = vcmp.lt.s32.totalorder %v374, 0
        %v805 = vand.u32 %v374, 2139095040
        %v806 = vshrl.u32 %v805, 23
        %v807 = vsub.s32 %v806, 127
        %v808 = vand.u32 2147483647, %v374
        %v809 = vand.u32 %v808, 8388607
        %v810 = vor.u32 %v809, 8388608
        %v811 = vsub.s32 0, %v810
        %v812 = vadd.s32 %v807, 1
        %vm813 = vcmp.gt.s32.totalorder %v812, 0
        %v814 = vsel %vm813, %v812, 0
        %v815 = vshrl.u32 %v814, 5
        %v816 = vand.u32 %v814, 31
        %v817 = vsub.s32 32, %v816
        %v818 = vshrl.u32 683565275, %v817
        %v819 = vshll.u32 683565275, %v816
        %v820 = vshrl.u32 2475754826, %v817
        %v821 = vor.u32 %v819, %v820
        %v822 = vshll.u32 2475754826, %v816
        %v823 = vshrl.u32 2131351028, %v817
        %v824 = vor.u32 %v822, %v823
        %v825 = vshll.u32 2131351028, %v816
        %v826 = vshrl.u32 2102212464, %v817
        %v827 = vor.u32 %v825, %v826
        %v828 = vshll.u32 2102212464, %v816
        %v829 = vshrl.u32 920167782, %v817
        %v830 = vor.u32 %v828, %v829
        %v831 = vshll.u32 920167782, %v816
        %v832 = vshrl.u32 1326507024, %v817
        %v833 = vor.u32 %v831, %v832
        %vm834 = vcmp.lt.s32.totalorder %v815, 1
        %vm835 = vcmp.lt.s32.totalorder %v815, 2
        %vm836 = vcmp.lt.s32.totalorder %v815, 3
        %vm837 = vcmp.lt.s32.totalorder %v815, 4
        %v838 = vsel %vm834, %v818, %v821
        %v839 = vsel %vm837, %v827, 2102212464
        %v840 = vsel %vm836, %v824, %v839
        %v841 = vsel %vm835, %v838, %v840
        %v842 = vsel %vm834, %v821, %v824
        %v843 = vsel %vm837, %v830, 920167782
        %v844 = vsel %vm836, %v827, %v843
        %v845 = vsel %vm835, %v842, %v844
        %v846 = vsel %vm834, %v824, %v827
        %v847 = vsel %vm837, %v833, 1326507024
        %v848 = vsel %vm836, %v830, %v847
        %v849 = vsel %vm835, %v846, %v848
        %v850 = vshll.u32 %v810, 8
        %v851 = vmul.u32.u64.compose %v850, %v849
        %v852 = vextract.low.u32 %v851
        %v853 = vextract.high.u32 %v851
        %v854 = vmul.u32.u64.compose %v850, %v845
        %v855 = vextract.low.u32 %v854
        %v856 = vextract.high.u32 %v854
        %v857 = vmul.u32 %v850, %v841
        %v858 = vadd.s32 %v853, %v855
        %vm859 = vc.u32 %v853, %v855
        %v860 = vadd.s32 %v856, 1
        %v861 = vsel %vm859, %v860, %v856
        %v862 = vadd.s32 %v857, %v861
        %v863 = vadd.s32 %v862, 536870912
        %v864 = vshrl.u32 %v863, 30
        %v865 = vshll.u32 %v864, 30
        %v866 = vsub.s32 %v862, %v865
        %vm867 = vcmp.lt.s32.totalorder %v866, 0
        %v868 = vsub.s32 0, %v866
        %v869 = vsel %vm867, %v868, %v866
        %v870 = vclz %v869
        %v871 = vsub.s32 %v870, 2
        %vm872 = vcmp.gt.s32.totalorder 0, %v871
        %v873 = vsel %vm872, 0, %v871
        %v874 = vsub.s32 32, %v873
        %v875 = vshll.u32 %v866, %v873
        %v876 = vshrl.u32 %v858, %v874
        %v877 = vor.u32 %v875, %v876
        %v878 = vsub.s32 4294967266, %v873
        %v879 = vadd.s32 %v878, 127
        %v880 = vshll.u32 %v879, 23
        %v881 = vor.u32 4788187, %v880
        %v882 = vand.u32 2147483647, %v881
        %v884 = vcvt.s32.f32 %v877
        %v885 = vmul.f32 %v884, %v882
        %v886 = vxor.u32 %v885, 2147483648
        %v887 = vsel %vm804, %v886, %v885
        %v888 = vsub.s32 4, %v864
        %v889 = vsel %vm804, %v888, %v864
        %v890 = vsel %vm803, %v374, %v887
        %v891 = vsel %vm803, 0, %v889
        %v892 = vcosq.f32.pop %v890
        %v893 = vsinq.f32.pop %v890
        %vm894 = vweird.f32 %v374
        %v895 = vadd.s32 %v891, 3
        %v896 = vand.u32 %v895, 3
        %vm897 = vcmp.lt.s32.totalorder %v896, 2
        %vm898 = vcmp.eq.s32.totalorder %v896, 0
        %v899 = vxor.u32 %v893, 2147483648
        %v900 = vsel %vm898, %v892, %v899
        %vm901 = vcmp.eq.s32.totalorder %v896, 2
        %v902 = vxor.u32 %v892, 2147483648
        %v903 = vsel %vm901, %v902, %v893
        %v904 = vsel %vm897, %v900, %v903
        %v905 = vsel %vm894, nan, %v904
        %v906 = vand.u32 2147483647, %v375
        %vm907 = vcmp.le.f32.partialorder %v906, 0.7853982
        %vm908 = vcmp.lt.s32.totalorder %v375, 0
        %v909 = vand.u32 %v375, 2139095040
        %v910 = vshrl.u32 %v909, 23
        %v911 = vsub.s32 %v910, 127
        %v912 = vand.u32 2147483647, %v375
        %v913 = vand.u32 %v912, 8388607
        %v914 = vor.u32 %v913, 8388608
        %v915 = vsub.s32 0, %v914
        %v916 = vadd.s32 %v911, 1
        %vm917 = vcmp.gt.s32.totalorder %v916, 0
        %v918 = vsel %vm917, %v916, 0
        %v919 = vshrl.u32 %v918, 5
        %v920 = vand.u32 %v918, 31
        %v921 = vsub.s32 32, %v920
        %v922 = vshrl.u32 683565275, %v921
        %v923 = vshll.u32 683565275, %v920
        %v924 = vshrl.u32 2475754826, %v921
        %v925 = vor.u32 %v923, %v924
        %v926 = vshll.u32 2475754826, %v920
        %v927 = vshrl.u32 2131351028, %v921
        %v928 = vor.u32 %v926, %v927
        %v929 = vshll.u32 2131351028, %v920
        %v930 = vshrl.u32 2102212464, %v921
        %v931 = vor.u32 %v929, %v930
        %v932 = vshll.u32 2102212464, %v920
        %v933 = vshrl.u32 920167782, %v921
        %v934 = vor.u32 %v932, %v933
        %v935 = vshll.u32 920167782, %v920
        %v936 = vshrl.u32 1326507024, %v921
        %v937 = vor.u32 %v935, %v936
        %vm938 = vcmp.lt.s32.totalorder %v919, 1
        %vm939 = vcmp.lt.s32.totalorder %v919, 2
        %vm940 = vcmp.lt.s32.totalorder %v919, 3
        %vm941 = vcmp.lt.s32.totalorder %v919, 4
        %v942 = vsel %vm938, %v922, %v925
        %v943 = vsel %vm941, %v931, 2102212464
        %v944 = vsel %vm940, %v928, %v943
        %v945 = vsel %vm939, %v942, %v944
        %v946 = vsel %vm938, %v925, %v928
        %v947 = vsel %vm941, %v934, 920167782
        %v948 = vsel %vm940, %v931, %v947
        %v949 = vsel %vm939, %v946, %v948
        %v950 = vsel %vm938, %v928, %v931
        %v951 = vsel %vm941, %v937, 1326507024
        %v952 = vsel %vm940, %v934, %v951
        %v953 = vsel %vm939, %v950, %v952
        %v954 = vshll.u32 %v914, 8
        %v955 = vmul.u32.u64.compose %v954, %v953
        %v956 = vextract.low.u32 %v955
        %v957 = vextract.high.u32 %v955
        %v958 = vmul.u32.u64.compose %v954, %v949
        %v959 = vextract.low.u32 %v958
        %v960 = vextract.high.u32 %v958
        %v961 = vmul.u32 %v954, %v945
        %v962 = vadd.s32 %v957, %v959
        %vm963 = vc.u32 %v957, %v959
        %v964 = vadd.s32 %v960, 1
        %v965 = vsel %vm963, %v964, %v960
        %v966 = vadd.s32 %v961, %v965
        %v967 = vadd.s32 %v966, 536870912
        %v968 = vshrl.u32 %v967, 30
        %v969 = vshll.u32 %v968, 30
        %v970 = vsub.s32 %v966, %v969
        %vm971 = vcmp.lt.s32.totalorder %v970, 0
        %v972 = vsub.s32 0, %v970
        %v973 = vsel %vm971, %v972, %v970
        %v974 = vclz %v973
        %v975 = vsub.s32 %v974, 2
        %vm976 = vcmp.gt.s32.totalorder 0, %v975
        %v977 = vsel %vm976, 0, %v975
        %v978 = vsub.s32 32, %v977
        %v979 = vshll.u32 %v970, %v977
        %v980 = vshrl.u32 %v962, %v978
        %v981 = vor.u32 %v979, %v980
        %v982 = vsub.s32 4294967266, %v977
        %v983 = vadd.s32 %v982, 127
        %v984 = vshll.u32 %v983, 23
        %v985 = vor.u32 4788187, %v984
        %v986 = vand.u32 2147483647, %v985
        %v988 = vcvt.s32.f32 %v981
        %v989 = vmul.f32 %v988, %v986
        %v990 = vxor.u32 %v989, 2147483648
        %v991 = vsel %vm908, %v990, %v989
        %v992 = vsub.s32 4, %v968
        %v993 = vsel %vm908, %v992, %v968
        %v994 = vsel %vm907, %v375, %v991
        %v995 = vsel %vm907, 0, %v993
        %v996 = vcosq.f32.pop %v994
        %v997 = vsinq.f32.pop %v994
        %vm998 = vweird.f32 %v375
        %v999 = vadd.s32 %v995, 3
        %v1000 = vand.u32 %v999, 3
        %vm1001 = vcmp.lt.s32.totalorder %v1000, 2
        %vm1002 = vcmp.eq.s32.totalorder %v1000, 0
        %v1003 = vxor.u32 %v997, 2147483648
        %v1004 = vsel %vm1002, %v996, %v1003
        %vm1005 = vcmp.eq.s32.totalorder %v1000, 2
        %v1006 = vxor.u32 %v996, 2147483648
        %v1007 = vsel %vm1005, %v1006, %v997
        %v1008 = vsel %vm1001, %v1004, %v1007
        %v1009 = vsel %vm998, nan, %v1008
        %v1010 = vand.u32 2147483647, %v376
        %vm1011 = vcmp.le.f32.partialorder %v1010, 0.7853982
        %vm1012 = vcmp.lt.s32.totalorder %v376, 0
        %v1013 = vand.u32 %v376, 2139095040
        %v1014 = vshrl.u32 %v1013, 23
        %v1015 = vsub.s32 %v1014, 127
        %v1016 = vand.u32 2147483647, %v376
        %v1017 = vand.u32 %v1016, 8388607
        %v1018 = vor.u32 %v1017, 8388608
        %v1019 = vsub.s32 0, %v1018
        %v1020 = vadd.s32 %v1015, 1
        %vm1021 = vcmp.gt.s32.totalorder %v1020, 0
        %v1022 = vsel %vm1021, %v1020, 0
        %v1023 = vshrl.u32 %v1022, 5
        %v1024 = vand.u32 %v1022, 31
        %v1025 = vsub.s32 32, %v1024
        %v1026 = vshrl.u32 683565275, %v1025
        %v1027 = vshll.u32 683565275, %v1024
        %v1028 = vshrl.u32 2475754826, %v1025
        %v1029 = vor.u32 %v1027, %v1028
        %v1030 = vshll.u32 2475754826, %v1024
        %v1031 = vshrl.u32 2131351028, %v1025
        %v1032 = vor.u32 %v1030, %v1031
        %v1033 = vshll.u32 2131351028, %v1024
        %v1034 = vshrl.u32 2102212464, %v1025
        %v1035 = vor.u32 %v1033, %v1034
        %v1036 = vshll.u32 2102212464, %v1024
        %v1037 = vshrl.u32 920167782, %v1025
        %v1038 = vor.u32 %v1036, %v1037
        %v1039 = vshll.u32 920167782, %v1024
        %v1040 = vshrl.u32 1326507024, %v1025
        %v1041 = vor.u32 %v1039, %v1040
        %vm1042 = vcmp.lt.s32.totalorder %v1023, 1
        %vm1043 = vcmp.lt.s32.totalorder %v1023, 2
        %vm1044 = vcmp.lt.s32.totalorder %v1023, 3
        %vm1045 = vcmp.lt.s32.totalorder %v1023, 4
        %v1046 = vsel %vm1042, %v1026, %v1029
        %v1047 = vsel %vm1045, %v1035, 2102212464
        %v1048 = vsel %vm1044, %v1032, %v1047
        %v1049 = vsel %vm1043, %v1046, %v1048
        %v1050 = vsel %vm1042, %v1029, %v1032
        %v1051 = vsel %vm1045, %v1038, 920167782
        %v1052 = vsel %vm1044, %v1035, %v1051
        %v1053 = vsel %vm1043, %v1050, %v1052
        %v1054 = vsel %vm1042, %v1032, %v1035
        %v1055 = vsel %vm1045, %v1041, 1326507024
        %v1056 = vsel %vm1044, %v1038, %v1055
        %v1057 = vsel %vm1043, %v1054, %v1056
        %v1058 = vshll.u32 %v1018, 8
        %v1059 = vmul.u32.u64.compose %v1058, %v1057
        %v1060 = vextract.low.u32 %v1059
        %v1061 = vextract.high.u32 %v1059
        %v1062 = vmul.u32.u64.compose %v1058, %v1053
        %v1063 = vextract.low.u32 %v1062
        %v1064 = vextract.high.u32 %v1062
        %v1065 = vmul.u32 %v1058, %v1049
        %v1066 = vadd.s32 %v1061, %v1063
        %vm1067 = vc.u32 %v1061, %v1063
        %v1068 = vadd.s32 %v1064, 1
        %v1069 = vsel %vm1067, %v1068, %v1064
        %v1070 = vadd.s32 %v1065, %v1069
        %v1071 = vadd.s32 %v1070, 536870912
        %v1072 = vshrl.u32 %v1071, 30
        %v1073 = vshll.u32 %v1072, 30
        %v1074 = vsub.s32 %v1070, %v1073
        %vm1075 = vcmp.lt.s32.totalorder %v1074, 0
        %v1076 = vsub.s32 0, %v1074
        %v1077 = vsel %vm1075, %v1076, %v1074
        %v1078 = vclz %v1077
        %v1079 = vsub.s32 %v1078, 2
        %vm1080 = vcmp.gt.s32.totalorder 0, %v1079
        %v1081 = vsel %vm1080, 0, %v1079
        %v1082 = vsub.s32 32, %v1081
        %v1083 = vshll.u32 %v1074, %v1081
        %v1084 = vshrl.u32 %v1066, %v1082
        %v1085 = vor.u32 %v1083, %v1084
        %v1086 = vsub.s32 4294967266, %v1081
        %v1087 = vadd.s32 %v1086, 127
        %v1088 = vshll.u32 %v1087, 23
        %v1089 = vor.u32 4788187, %v1088
        %v1090 = vand.u32 2147483647, %v1089
        %v1092 = vcvt.s32.f32 %v1085
        %v1093 = vmul.f32 %v1092, %v1090
        %v1094 = vxor.u32 %v1093, 2147483648
        %v1095 = vsel %vm1012, %v1094, %v1093
        %v1096 = vsub.s32 4, %v1072
        %v1097 = vsel %vm1012, %v1096, %v1072
        %v1098 = vsel %vm1011, %v376, %v1095
        %v1099 = vsel %vm1011, 0, %v1097
        %v1100 = vcosq.f32.pop %v1098
        %v1101 = vsinq.f32.pop %v1098
        %vm1102 = vweird.f32 %v376
        %v1103 = vadd.s32 %v1099, 3
        %v1104 = vand.u32 %v1103, 3
        %vm1105 = vcmp.lt.s32.totalorder %v1104, 2
        %vm1106 = vcmp.eq.s32.totalorder %v1104, 0
        %v1107 = vxor.u32 %v1101, 2147483648
        %v1108 = vsel %vm1106, %v1100, %v1107
        %vm1109 = vcmp.eq.s32.totalorder %v1104, 2
        %v1110 = vxor.u32 %v1100, 2147483648
        %v1111 = vsel %vm1109, %v1110, %v1101
        %v1112 = vsel %vm1105, %v1108, %v1111
        %v1113 = vsel %vm1102, nan, %v1112
        %v1114 = vand.u32 2147483647, %v377
        %vm1115 = vcmp.le.f32.partialorder %v1114, 0.7853982
        %vm1116 = vcmp.lt.s32.totalorder %v377, 0
        %v1117 = vand.u32 %v377, 2139095040
        %v1118 = vshrl.u32 %v1117, 23
        %v1119 = vsub.s32 %v1118, 127
        %v1120 = vand.u32 2147483647, %v377
        %v1121 = vand.u32 %v1120, 8388607
        %v1122 = vor.u32 %v1121, 8388608
        %v1123 = vsub.s32 0, %v1122
        %v1124 = vadd.s32 %v1119, 1
        %vm1125 = vcmp.gt.s32.totalorder %v1124, 0
        %v1126 = vsel %vm1125, %v1124, 0
        %v1127 = vshrl.u32 %v1126, 5
        %v1128 = vand.u32 %v1126, 31
        %v1129 = vsub.s32 32, %v1128
        %v1130 = vshrl.u32 683565275, %v1129
        %v1131 = vshll.u32 683565275, %v1128
        %v1132 = vshrl.u32 2475754826, %v1129
        %v1133 = vor.u32 %v1131, %v1132
        %v1134 = vshll.u32 2475754826, %v1128
        %v1135 = vshrl.u32 2131351028, %v1129
        %v1136 = vor.u32 %v1134, %v1135
        %v1137 = vshll.u32 2131351028, %v1128
        %v1138 = vshrl.u32 2102212464, %v1129
        %v1139 = vor.u32 %v1137, %v1138
        %v1140 = vshll.u32 2102212464, %v1128
        %v1141 = vshrl.u32 920167782, %v1129
        %v1142 = vor.u32 %v1140, %v1141
        %v1143 = vshll.u32 920167782, %v1128
        %v1144 = vshrl.u32 1326507024, %v1129
        %v1145 = vor.u32 %v1143, %v1144
        %vm1146 = vcmp.lt.s32.totalorder %v1127, 1
        %vm1147 = vcmp.lt.s32.totalorder %v1127, 2
        %vm1148 = vcmp.lt.s32.totalorder %v1127, 3
        %vm1149 = vcmp.lt.s32.totalorder %v1127, 4
        %v1150 = vsel %vm1146, %v1130, %v1133
        %v1151 = vsel %vm1149, %v1139, 2102212464
        %v1152 = vsel %vm1148, %v1136, %v1151
        %v1153 = vsel %vm1147, %v1150, %v1152
        %v1154 = vsel %vm1146, %v1133, %v1136
        %v1155 = vsel %vm1149, %v1142, 920167782
        %v1156 = vsel %vm1148, %v1139, %v1155
        %v1157 = vsel %vm1147, %v1154, %v1156
        %v1158 = vsel %vm1146, %v1136, %v1139
        %v1159 = vsel %vm1149, %v1145, 1326507024
        %v1160 = vsel %vm1148, %v1142, %v1159
        %v1161 = vsel %vm1147, %v1158, %v1160
        %v1162 = vshll.u32 %v1122, 8
        %v1163 = vmul.u32.u64.compose %v1162, %v1161
        %v1164 = vextract.low.u32 %v1163
        %v1165 = vextract.high.u32 %v1163
        %v1166 = vmul.u32.u64.compose %v1162, %v1157
        %v1167 = vextract.low.u32 %v1166
        %v1168 = vextract.high.u32 %v1166
        %v1169 = vmul.u32 %v1162, %v1153
        %v1170 = vadd.s32 %v1165, %v1167
        %vm1171 = vc.u32 %v1165, %v1167
        %v1172 = vadd.s32 %v1168, 1
        %v1173 = vsel %vm1171, %v1172, %v1168
        %v1174 = vadd.s32 %v1169, %v1173
        %v1175 = vadd.s32 %v1174, 536870912
        %v1176 = vshrl.u32 %v1175, 30
        %v1177 = vshll.u32 %v1176, 30
        %v1178 = vsub.s32 %v1174, %v1177
        %vm1179 = vcmp.lt.s32.totalorder %v1178, 0
        %v1180 = vsub.s32 0, %v1178
        %v1181 = vsel %vm1179, %v1180, %v1178
        %v1182 = vclz %v1181
        %v1183 = vsub.s32 %v1182, 2
        %vm1184 = vcmp.gt.s32.totalorder 0, %v1183
        %v1185 = vsel %vm1184, 0, %v1183
        %v1186 = vsub.s32 32, %v1185
        %v1187 = vshll.u32 %v1178, %v1185
        %v1188 = vshrl.u32 %v1170, %v1186
        %v1189 = vor.u32 %v1187, %v1188
        %v1190 = vsub.s32 4294967266, %v1185
        %v1191 = vadd.s32 %v1190, 127
        %v1192 = vshll.u32 %v1191, 23
        %v1193 = vor.u32 4788187, %v1192
        %v1194 = vand.u32 2147483647, %v1193
        %v1196 = vcvt.s32.f32 %v1189
        %v1197 = vmul.f32 %v1196, %v1194
        %v1198 = vxor.u32 %v1197, 2147483648
        %v1199 = vsel %vm1116, %v1198, %v1197
        %v1200 = vsub.s32 4, %v1176
        %v1201 = vsel %vm1116, %v1200, %v1176
        %v1202 = vsel %vm1115, %v377, %v1199
        %v1203 = vsel %vm1115, 0, %v1201
        %v1204 = vcosq.f32.pop %v1202
        %v1205 = vsinq.f32.pop %v1202
        %vm1206 = vweird.f32 %v377
        %v1207 = vadd.s32 %v1203, 3
        %v1208 = vand.u32 %v1207, 3
        %vm1209 = vcmp.lt.s32.totalorder %v1208, 2
        %vm1210 = vcmp.eq.s32.totalorder %v1208, 0
        %v1211 = vxor.u32 %v1205, 2147483648
        %v1212 = vsel %vm1210, %v1204, %v1211
        %vm1213 = vcmp.eq.s32.totalorder %v1208, 2
        %v1214 = vxor.u32 %v1204, 2147483648
        %v1215 = vsel %vm1213, %v1214, %v1205
        %v1216 = vsel %vm1209, %v1212, %v1215
        %v1217 = vsel %vm1206, nan, %v1216
        %v1218 = vand.u32 2147483647, %v378
        %vm1219 = vcmp.le.f32.partialorder %v1218, 0.7853982
        %vm1220 = vcmp.lt.s32.totalorder %v378, 0
        %v1221 = vand.u32 %v378, 2139095040
        %v1222 = vshrl.u32 %v1221, 23
        %v1223 = vsub.s32 %v1222, 127
        %v1224 = vand.u32 2147483647, %v378
        %v1225 = vand.u32 %v1224, 8388607
        %v1226 = vor.u32 %v1225, 8388608
        %v1227 = vsub.s32 0, %v1226
        %v1228 = vadd.s32 %v1223, 1
        %vm1229 = vcmp.gt.s32.totalorder %v1228, 0
        %v1230 = vsel %vm1229, %v1228, 0
        %v1231 = vshrl.u32 %v1230, 5
        %v1232 = vand.u32 %v1230, 31
        %v1233 = vsub.s32 32, %v1232
        %v1234 = vshrl.u32 683565275, %v1233
        %v1235 = vshll.u32 683565275, %v1232
        %v1236 = vshrl.u32 2475754826, %v1233
        %v1237 = vor.u32 %v1235, %v1236
        %v1238 = vshll.u32 2475754826, %v1232
        %v1239 = vshrl.u32 2131351028, %v1233
        %v1240 = vor.u32 %v1238, %v1239
        %v1241 = vshll.u32 2131351028, %v1232
        %v1242 = vshrl.u32 2102212464, %v1233
        %v1243 = vor.u32 %v1241, %v1242
        %v1244 = vshll.u32 2102212464, %v1232
        %v1245 = vshrl.u32 920167782, %v1233
        %v1246 = vor.u32 %v1244, %v1245
        %v1247 = vshll.u32 920167782, %v1232
        %v1248 = vshrl.u32 1326507024, %v1233
        %v1249 = vor.u32 %v1247, %v1248
        %vm1250 = vcmp.lt.s32.totalorder %v1231, 1
        %vm1251 = vcmp.lt.s32.totalorder %v1231, 2
        %vm1252 = vcmp.lt.s32.totalorder %v1231, 3
        %vm1253 = vcmp.lt.s32.totalorder %v1231, 4
        %v1254 = vsel %vm1250, %v1234, %v1237
        %v1255 = vsel %vm1253, %v1243, 2102212464
        %v1256 = vsel %vm1252, %v1240, %v1255
        %v1257 = vsel %vm1251, %v1254, %v1256
        %v1258 = vsel %vm1250, %v1237, %v1240
        %v1259 = vsel %vm1253, %v1246, 920167782
        %v1260 = vsel %vm1252, %v1243, %v1259
        %v1261 = vsel %vm1251, %v1258, %v1260
        %v1262 = vsel %vm1250, %v1240, %v1243
        %v1263 = vsel %vm1253, %v1249, 1326507024
        %v1264 = vsel %vm1252, %v1246, %v1263
        %v1265 = vsel %vm1251, %v1262, %v1264
        %v1266 = vshll.u32 %v1226, 8
        %v1267 = vmul.u32.u64.compose %v1266, %v1265
        %v1268 = vextract.low.u32 %v1267
        %v1269 = vextract.high.u32 %v1267
        %v1270 = vmul.u32.u64.compose %v1266, %v1261
        %v1271 = vextract.low.u32 %v1270
        %v1272 = vextract.high.u32 %v1270
        %v1273 = vmul.u32 %v1266, %v1257
        %v1274 = vadd.s32 %v1269, %v1271
        %vm1275 = vc.u32 %v1269, %v1271
        %v1276 = vadd.s32 %v1272, 1
        %v1277 = vsel %vm1275, %v1276, %v1272
        %v1278 = vadd.s32 %v1273, %v1277
        %v1279 = vadd.s32 %v1278, 536870912
        %v1280 = vshrl.u32 %v1279, 30
        %v1281 = vshll.u32 %v1280, 30
        %v1282 = vsub.s32 %v1278, %v1281
        %vm1283 = vcmp.lt.s32.totalorder %v1282, 0
        %v1284 = vsub.s32 0, %v1282
        %v1285 = vsel %vm1283, %v1284, %v1282
        %v1286 = vclz %v1285
        %v1287 = vsub.s32 %v1286, 2
        %vm1288 = vcmp.gt.s32.totalorder 0, %v1287
        %v1289 = vsel %vm1288, 0, %v1287
        %v1290 = vsub.s32 32, %v1289
        %v1291 = vshll.u32 %v1282, %v1289
        %v1292 = vshrl.u32 %v1274, %v1290
        %v1293 = vor.u32 %v1291, %v1292
        %v1294 = vsub.s32 4294967266, %v1289
        %v1295 = vadd.s32 %v1294, 127
        %v1296 = vshll.u32 %v1295, 23
        %v1297 = vor.u32 4788187, %v1296
        %v1298 = vand.u32 2147483647, %v1297
        %v1300 = vcvt.s32.f32 %v1293
        %v1301 = vmul.f32 %v1300, %v1298
        %v1302 = vxor.u32 %v1301, 2147483648
        %v1303 = vsel %vm1220, %v1302, %v1301
        %v1304 = vsub.s32 4, %v1280
        %v1305 = vsel %vm1220, %v1304, %v1280
        %v1306 = vsel %vm1219, %v378, %v1303
        %v1307 = vsel %vm1219, 0, %v1305
        %v1308 = vcosq.f32.pop %v1306
        %v1309 = vsinq.f32.pop %v1306
        %vm1310 = vweird.f32 %v378
        %v1311 = vadd.s32 %v1307, 3
        %v1312 = vand.u32 %v1311, 3
        %vm1313 = vcmp.lt.s32.totalorder %v1312, 2
        %vm1314 = vcmp.eq.s32.totalorder %v1312, 0
        %v1315 = vxor.u32 %v1309, 2147483648
        %v1316 = vsel %vm1314, %v1308, %v1315
        %vm1317 = vcmp.eq.s32.totalorder %v1312, 2
        %v1318 = vxor.u32 %v1308, 2147483648
        %v1319 = vsel %vm1317, %v1318, %v1309
        %v1320 = vsel %vm1313, %v1316, %v1319
        %v1321 = vsel %vm1310, nan, %v1320
        %v1322 = vand.u32 2147483647, %v379
        %vm1323 = vcmp.le.f32.partialorder %v1322, 0.7853982
        %vm1324 = vcmp.lt.s32.totalorder %v379, 0
        %v1325 = vand.u32 %v379, 2139095040
        %v1326 = vshrl.u32 %v1325, 23
        %v1327 = vsub.s32 %v1326, 127
        %v1328 = vand.u32 2147483647, %v379
        %v1329 = vand.u32 %v1328, 8388607
        %v1330 = vor.u32 %v1329, 8388608
        %v1331 = vsub.s32 0, %v1330
        %v1332 = vadd.s32 %v1327, 1
        %vm1333 = vcmp.gt.s32.totalorder %v1332, 0
        %v1334 = vsel %vm1333, %v1332, 0
        %v1335 = vshrl.u32 %v1334, 5
        %v1336 = vand.u32 %v1334, 31
        %v1337 = vsub.s32 32, %v1336
        %v1338 = vshrl.u32 683565275, %v1337
        %v1339 = vshll.u32 683565275, %v1336
        %v1340 = vshrl.u32 2475754826, %v1337
        %v1341 = vor.u32 %v1339, %v1340
        %v1342 = vshll.u32 2475754826, %v1336
        %v1343 = vshrl.u32 2131351028, %v1337
        %v1344 = vor.u32 %v1342, %v1343
        %v1345 = vshll.u32 2131351028, %v1336
        %v1346 = vshrl.u32 2102212464, %v1337
        %v1347 = vor.u32 %v1345, %v1346
        %v1348 = vshll.u32 2102212464, %v1336
        %v1349 = vshrl.u32 920167782, %v1337
        %v1350 = vor.u32 %v1348, %v1349
        %v1351 = vshll.u32 920167782, %v1336
        %v1352 = vshrl.u32 1326507024, %v1337
        %v1353 = vor.u32 %v1351, %v1352
        %vm1354 = vcmp.lt.s32.totalorder %v1335, 1
        %vm1355 = vcmp.lt.s32.totalorder %v1335, 2
        %vm1356 = vcmp.lt.s32.totalorder %v1335, 3
        %vm1357 = vcmp.lt.s32.totalorder %v1335, 4
        %v1358 = vsel %vm1354, %v1338, %v1341
        %v1359 = vsel %vm1357, %v1347, 2102212464
        %v1360 = vsel %vm1356, %v1344, %v1359
        %v1361 = vsel %vm1355, %v1358, %v1360
        %v1362 = vsel %vm1354, %v1341, %v1344
        %v1363 = vsel %vm1357, %v1350, 920167782
        %v1364 = vsel %vm1356, %v1347, %v1363
        %v1365 = vsel %vm1355, %v1362, %v1364
        %v1366 = vsel %vm1354, %v1344, %v1347
        %v1367 = vsel %vm1357, %v1353, 1326507024
        %v1368 = vsel %vm1356, %v1350, %v1367
        %v1369 = vsel %vm1355, %v1366, %v1368
        %v1370 = vshll.u32 %v1330, 8
        %v1371 = vmul.u32.u64.compose %v1370, %v1369
        %v1372 = vextract.low.u32 %v1371
        %v1373 = vextract.high.u32 %v1371
        %v1374 = vmul.u32.u64.compose %v1370, %v1365
        %v1375 = vextract.low.u32 %v1374
        %v1376 = vextract.high.u32 %v1374
        %v1377 = vmul.u32 %v1370, %v1361
        %v1378 = vadd.s32 %v1373, %v1375
        %vm1379 = vc.u32 %v1373, %v1375
        %v1380 = vadd.s32 %v1376, 1
        %v1381 = vsel %vm1379, %v1380, %v1376
        %v1382 = vadd.s32 %v1377, %v1381
        %v1383 = vadd.s32 %v1382, 536870912
        %v1384 = vshrl.u32 %v1383, 30
        %v1385 = vshll.u32 %v1384, 30
        %v1386 = vsub.s32 %v1382, %v1385
        %vm1387 = vcmp.lt.s32.totalorder %v1386, 0
        %v1388 = vsub.s32 0, %v1386
        %v1389 = vsel %vm1387, %v1388, %v1386
        %v1390 = vclz %v1389
        %v1391 = vsub.s32 %v1390, 2
        %vm1392 = vcmp.gt.s32.totalorder 0, %v1391
        %v1393 = vsel %vm1392, 0, %v1391
        %v1394 = vsub.s32 32, %v1393
        %v1395 = vshll.u32 %v1386, %v1393
        %v1396 = vshrl.u32 %v1378, %v1394
        %v1397 = vor.u32 %v1395, %v1396
        %v1398 = vsub.s32 4294967266, %v1393
        %v1399 = vadd.s32 %v1398, 127
        %v1400 = vshll.u32 %v1399, 23
        %v1401 = vor.u32 4788187, %v1400
        %v1402 = vand.u32 2147483647, %v1401
        %v1404 = vcvt.s32.f32 %v1397
        %v1405 = vmul.f32 %v1404, %v1402
        %v1406 = vxor.u32 %v1405, 2147483648
        %v1407 = vsel %vm1324, %v1406, %v1405
        %v1408 = vsub.s32 4, %v1384
        %v1409 = vsel %vm1324, %v1408, %v1384
        %v1410 = vsel %vm1323, %v379, %v1407
        %v1411 = vsel %vm1323, 0, %v1409
        %v1412 = vcosq.f32.pop %v1410
        %v1413 = vsinq.f32.pop %v1410
        %vm1414 = vweird.f32 %v379
        %v1415 = vadd.s32 %v1411, 3
        %v1416 = vand.u32 %v1415, 3
        %vm1417 = vcmp.lt.s32.totalorder %v1416, 2
        %vm1418 = vcmp.eq.s32.totalorder %v1416, 0
        %v1419 = vxor.u32 %v1413, 2147483648
        %v1420 = vsel %vm1418, %v1412, %v1419
        %vm1421 = vcmp.eq.s32.totalorder %v1416, 2
        %v1422 = vxor.u32 %v1412, 2147483648
        %v1423 = vsel %vm1421, %v1422, %v1413
        %v1424 = vsel %vm1417, %v1420, %v1423
        %v1425 = vsel %vm1414, nan, %v1424
        %v1426 = vand.u32 2147483647, %v380
        %vm1427 = vcmp.le.f32.partialorder %v1426, 0.7853982
        %vm1428 = vcmp.lt.s32.totalorder %v380, 0
        %v1429 = vand.u32 %v380, 2139095040
        %v1430 = vshrl.u32 %v1429, 23
        %v1431 = vsub.s32 %v1430, 127
        %v1432 = vand.u32 2147483647, %v380
        %v1433 = vand.u32 %v1432, 8388607
        %v1434 = vor.u32 %v1433, 8388608
        %v1435 = vsub.s32 0, %v1434
        %v1436 = vadd.s32 %v1431, 1
        %vm1437 = vcmp.gt.s32.totalorder %v1436, 0
        %v1438 = vsel %vm1437, %v1436, 0
        %v1439 = vshrl.u32 %v1438, 5
        %v1440 = vand.u32 %v1438, 31
        %v1441 = vsub.s32 32, %v1440
        %v1442 = vshrl.u32 683565275, %v1441
        %v1443 = vshll.u32 683565275, %v1440
        %v1444 = vshrl.u32 2475754826, %v1441
        %v1445 = vor.u32 %v1443, %v1444
        %v1446 = vshll.u32 2475754826, %v1440
        %v1447 = vshrl.u32 2131351028, %v1441
        %v1448 = vor.u32 %v1446, %v1447
        %v1449 = vshll.u32 2131351028, %v1440
        %v1450 = vshrl.u32 2102212464, %v1441
        %v1451 = vor.u32 %v1449, %v1450
        %v1452 = vshll.u32 2102212464, %v1440
        %v1453 = vshrl.u32 920167782, %v1441
        %v1454 = vor.u32 %v1452, %v1453
        %v1455 = vshll.u32 920167782, %v1440
        %v1456 = vshrl.u32 1326507024, %v1441
        %v1457 = vor.u32 %v1455, %v1456
        %vm1458 = vcmp.lt.s32.totalorder %v1439, 1
        %vm1459 = vcmp.lt.s32.totalorder %v1439, 2
        %vm1460 = vcmp.lt.s32.totalorder %v1439, 3
        %vm1461 = vcmp.lt.s32.totalorder %v1439, 4
        %v1462 = vsel %vm1458, %v1442, %v1445
        %v1463 = vsel %vm1461, %v1451, 2102212464
        %v1464 = vsel %vm1460, %v1448, %v1463
        %v1465 = vsel %vm1459, %v1462, %v1464
        %v1466 = vsel %vm1458, %v1445, %v1448
        %v1467 = vsel %vm1461, %v1454, 920167782
        %v1468 = vsel %vm1460, %v1451, %v1467
        %v1469 = vsel %vm1459, %v1466, %v1468
        %v1470 = vsel %vm1458, %v1448, %v1451
        %v1471 = vsel %vm1461, %v1457, 1326507024
        %v1472 = vsel %vm1460, %v1454, %v1471
        %v1473 = vsel %vm1459, %v1470, %v1472
        %v1474 = vshll.u32 %v1434, 8
        %v1475 = vmul.u32.u64.compose %v1474, %v1473
        %v1476 = vextract.low.u32 %v1475
        %v1477 = vextract.high.u32 %v1475
        %v1478 = vmul.u32.u64.compose %v1474, %v1469
        %v1479 = vextract.low.u32 %v1478
        %v1480 = vextract.high.u32 %v1478
        %v1481 = vmul.u32 %v1474, %v1465
        %v1482 = vadd.s32 %v1477, %v1479
        %vm1483 = vc.u32 %v1477, %v1479
        %v1484 = vadd.s32 %v1480, 1
        %v1485 = vsel %vm1483, %v1484, %v1480
        %v1486 = vadd.s32 %v1481, %v1485
        %v1487 = vadd.s32 %v1486, 536870912
        %v1488 = vshrl.u32 %v1487, 30
        %v1489 = vshll.u32 %v1488, 30
        %v1490 = vsub.s32 %v1486, %v1489
        %vm1491 = vcmp.lt.s32.totalorder %v1490, 0
        %v1492 = vsub.s32 0, %v1490
        %v1493 = vsel %vm1491, %v1492, %v1490
        %v1494 = vclz %v1493
        %v1495 = vsub.s32 %v1494, 2
        %vm1496 = vcmp.gt.s32.totalorder 0, %v1495
        %v1497 = vsel %vm1496, 0, %v1495
        %v1498 = vsub.s32 32, %v1497
        %v1499 = vshll.u32 %v1490, %v1497
        %v1500 = vshrl.u32 %v1482, %v1498
        %v1501 = vor.u32 %v1499, %v1500
        %v1502 = vsub.s32 4294967266, %v1497
        %v1503 = vadd.s32 %v1502, 127
        %v1504 = vshll.u32 %v1503, 23
        %v1505 = vor.u32 4788187, %v1504
        %v1506 = vand.u32 2147483647, %v1505
        %v1508 = vcvt.s32.f32 %v1501
        %v1509 = vmul.f32 %v1508, %v1506
        %v1510 = vxor.u32 %v1509, 2147483648
        %v1511 = vsel %vm1428, %v1510, %v1509
        %v1512 = vsub.s32 4, %v1488
        %v1513 = vsel %vm1428, %v1512, %v1488
        %v1514 = vsel %vm1427, %v380, %v1511
        %v1515 = vsel %vm1427, 0, %v1513
        %v1516 = vcosq.f32.pop %v1514
        %v1517 = vsinq.f32.pop %v1514
        %vm1518 = vweird.f32 %v380
        %v1519 = vadd.s32 %v1515, 3
        %v1520 = vand.u32 %v1519, 3
        %vm1521 = vcmp.lt.s32.totalorder %v1520, 2
        %vm1522 = vcmp.eq.s32.totalorder %v1520, 0
        %v1523 = vxor.u32 %v1517, 2147483648
        %v1524 = vsel %vm1522, %v1516, %v1523
        %vm1525 = vcmp.eq.s32.totalorder %v1520, 2
        %v1526 = vxor.u32 %v1516, 2147483648
        %v1527 = vsel %vm1525, %v1526, %v1517
        %v1528 = vsel %vm1521, %v1524, %v1527
        %v1529 = vsel %vm1518, nan, %v1528
        %v1530 = vand.u32 2147483647, %v381
        %vm1531 = vcmp.le.f32.partialorder %v1530, 0.7853982
        %vm1532 = vcmp.lt.s32.totalorder %v381, 0
        %v1533 = vand.u32 %v381, 2139095040
        %v1534 = vshrl.u32 %v1533, 23
        %v1535 = vsub.s32 %v1534, 127
        %v1536 = vand.u32 2147483647, %v381
        %v1537 = vand.u32 %v1536, 8388607
        %v1538 = vor.u32 %v1537, 8388608
        %v1539 = vsub.s32 0, %v1538
        %v1540 = vadd.s32 %v1535, 1
        %vm1541 = vcmp.gt.s32.totalorder %v1540, 0
        %v1542 = vsel %vm1541, %v1540, 0
        %v1543 = vshrl.u32 %v1542, 5
        %v1544 = vand.u32 %v1542, 31
        %v1545 = vsub.s32 32, %v1544
        %v1546 = vshrl.u32 683565275, %v1545
        %v1547 = vshll.u32 683565275, %v1544
        %v1548 = vshrl.u32 2475754826, %v1545
        %v1549 = vor.u32 %v1547, %v1548
        %v1550 = vshll.u32 2475754826, %v1544
        %v1551 = vshrl.u32 2131351028, %v1545
        %v1552 = vor.u32 %v1550, %v1551
        %v1553 = vshll.u32 2131351028, %v1544
        %v1554 = vshrl.u32 2102212464, %v1545
        %v1555 = vor.u32 %v1553, %v1554
        %v1556 = vshll.u32 2102212464, %v1544
        %v1557 = vshrl.u32 920167782, %v1545
        %v1558 = vor.u32 %v1556, %v1557
        %v1559 = vshll.u32 920167782, %v1544
        %v1560 = vshrl.u32 1326507024, %v1545
        %v1561 = vor.u32 %v1559, %v1560
        %vm1562 = vcmp.lt.s32.totalorder %v1543, 1
        %vm1563 = vcmp.lt.s32.totalorder %v1543, 2
        %vm1564 = vcmp.lt.s32.totalorder %v1543, 3
        %vm1565 = vcmp.lt.s32.totalorder %v1543, 4
        %v1566 = vsel %vm1562, %v1546, %v1549
        %v1567 = vsel %vm1565, %v1555, 2102212464
        %v1568 = vsel %vm1564, %v1552, %v1567
        %v1569 = vsel %vm1563, %v1566, %v1568
        %v1570 = vsel %vm1562, %v1549, %v1552
        %v1571 = vsel %vm1565, %v1558, 920167782
        %v1572 = vsel %vm1564, %v1555, %v1571
        %v1573 = vsel %vm1563, %v1570, %v1572
        %v1574 = vsel %vm1562, %v1552, %v1555
        %v1575 = vsel %vm1565, %v1561, 1326507024
        %v1576 = vsel %vm1564, %v1558, %v1575
        %v1577 = vsel %vm1563, %v1574, %v1576
        %v1578 = vshll.u32 %v1538, 8
        %v1579 = vmul.u32.u64.compose %v1578, %v1577
        %v1580 = vextract.low.u32 %v1579
        %v1581 = vextract.high.u32 %v1579
        %v1582 = vmul.u32.u64.compose %v1578, %v1573
        %v1583 = vextract.low.u32 %v1582
        %v1584 = vextract.high.u32 %v1582
        %v1585 = vmul.u32 %v1578, %v1569
        %v1586 = vadd.s32 %v1581, %v1583
        %vm1587 = vc.u32 %v1581, %v1583
        %v1588 = vadd.s32 %v1584, 1
        %v1589 = vsel %vm1587, %v1588, %v1584
        %v1590 = vadd.s32 %v1585, %v1589
        %v1591 = vadd.s32 %v1590, 536870912
        %v1592 = vshrl.u32 %v1591, 30
        %v1593 = vshll.u32 %v1592, 30
        %v1594 = vsub.s32 %v1590, %v1593
        %vm1595 = vcmp.lt.s32.totalorder %v1594, 0
        %v1596 = vsub.s32 0, %v1594
        %v1597 = vsel %vm1595, %v1596, %v1594
        %v1598 = vclz %v1597
        %v1599 = vsub.s32 %v1598, 2
        %vm1600 = vcmp.gt.s32.totalorder 0, %v1599
        %v1601 = vsel %vm1600, 0, %v1599
        %v1602 = vsub.s32 32, %v1601
        %v1603 = vshll.u32 %v1594, %v1601
        %v1604 = vshrl.u32 %v1586, %v1602
        %v1605 = vor.u32 %v1603, %v1604
        %v1606 = vsub.s32 4294967266, %v1601
        %v1607 = vadd.s32 %v1606, 127
        %v1608 = vshll.u32 %v1607, 23
        %v1609 = vor.u32 4788187, %v1608
        %v1610 = vand.u32 2147483647, %v1609
        %v1612 = vcvt.s32.f32 %v1605
        %v1613 = vmul.f32 %v1612, %v1610
        %v1614 = vxor.u32 %v1613, 2147483648
        %v1615 = vsel %vm1532, %v1614, %v1613
        %v1616 = vsub.s32 4, %v1592
        %v1617 = vsel %vm1532, %v1616, %v1592
        %v1618 = vsel %vm1531, %v381, %v1615
        %v1619 = vsel %vm1531, 0, %v1617
        %v1620 = vcosq.f32.pop %v1618
        %v1621 = vsinq.f32.pop %v1618
        %vm1622 = vweird.f32 %v381
        %v1623 = vadd.s32 %v1619, 3
        %v1624 = vand.u32 %v1623, 3
        %vm1625 = vcmp.lt.s32.totalorder %v1624, 2
        %vm1626 = vcmp.eq.s32.totalorder %v1624, 0
        %v1627 = vxor.u32 %v1621, 2147483648
        %v1628 = vsel %vm1626, %v1620, %v1627
        %vm1629 = vcmp.eq.s32.totalorder %v1624, 2
        %v1630 = vxor.u32 %v1620, 2147483648
        %v1631 = vsel %vm1629, %v1630, %v1621
        %v1632 = vsel %vm1625, %v1628, %v1631
        %v1633 = vsel %vm1622, nan, %v1632
        %v1634 = vand.u32 2147483647, %v382
        %vm1635 = vcmp.le.f32.partialorder %v1634, 0.7853982
        %vm1636 = vcmp.lt.s32.totalorder %v382, 0
        %v1637 = vand.u32 %v382, 2139095040
        %v1638 = vshrl.u32 %v1637, 23
        %v1639 = vsub.s32 %v1638, 127
        %v1640 = vand.u32 2147483647, %v382
        %v1641 = vand.u32 %v1640, 8388607
        %v1642 = vor.u32 %v1641, 8388608
        %v1643 = vsub.s32 0, %v1642
        %v1644 = vadd.s32 %v1639, 1
        %vm1645 = vcmp.gt.s32.totalorder %v1644, 0
        %v1646 = vsel %vm1645, %v1644, 0
        %v1647 = vshrl.u32 %v1646, 5
        %v1648 = vand.u32 %v1646, 31
        %v1649 = vsub.s32 32, %v1648
        %v1650 = vshrl.u32 683565275, %v1649
        %v1651 = vshll.u32 683565275, %v1648
        %v1652 = vshrl.u32 2475754826, %v1649
        %v1653 = vor.u32 %v1651, %v1652
        %v1654 = vshll.u32 2475754826, %v1648
        %v1655 = vshrl.u32 2131351028, %v1649
        %v1656 = vor.u32 %v1654, %v1655
        %v1657 = vshll.u32 2131351028, %v1648
        %v1658 = vshrl.u32 2102212464, %v1649
        %v1659 = vor.u32 %v1657, %v1658
        %v1660 = vshll.u32 2102212464, %v1648
        %v1661 = vshrl.u32 920167782, %v1649
        %v1662 = vor.u32 %v1660, %v1661
        %v1663 = vshll.u32 920167782, %v1648
        %v1664 = vshrl.u32 1326507024, %v1649
        %v1665 = vor.u32 %v1663, %v1664
        %vm1666 = vcmp.lt.s32.totalorder %v1647, 1
        %vm1667 = vcmp.lt.s32.totalorder %v1647, 2
        %vm1668 = vcmp.lt.s32.totalorder %v1647, 3
        %vm1669 = vcmp.lt.s32.totalorder %v1647, 4
        %v1670 = vsel %vm1666, %v1650, %v1653
        %v1671 = vsel %vm1669, %v1659, 2102212464
        %v1672 = vsel %vm1668, %v1656, %v1671
        %v1673 = vsel %vm1667, %v1670, %v1672
        %v1674 = vsel %vm1666, %v1653, %v1656
        %v1675 = vsel %vm1669, %v1662, 920167782
        %v1676 = vsel %vm1668, %v1659, %v1675
        %v1677 = vsel %vm1667, %v1674, %v1676
        %v1678 = vsel %vm1666, %v1656, %v1659
        %v1679 = vsel %vm1669, %v1665, 1326507024
        %v1680 = vsel %vm1668, %v1662, %v1679
        %v1681 = vsel %vm1667, %v1678, %v1680
        %v1682 = vshll.u32 %v1642, 8
        %v1683 = vmul.u32.u64.compose %v1682, %v1681
        %v1684 = vextract.low.u32 %v1683
        %v1685 = vextract.high.u32 %v1683
        %v1686 = vmul.u32.u64.compose %v1682, %v1677
        %v1687 = vextract.low.u32 %v1686
        %v1688 = vextract.high.u32 %v1686
        %v1689 = vmul.u32 %v1682, %v1673
        %v1690 = vadd.s32 %v1685, %v1687
        %vm1691 = vc.u32 %v1685, %v1687
        %v1692 = vadd.s32 %v1688, 1
        %v1693 = vsel %vm1691, %v1692, %v1688
        %v1694 = vadd.s32 %v1689, %v1693
        %v1695 = vadd.s32 %v1694, 536870912
        %v1696 = vshrl.u32 %v1695, 30
        %v1697 = vshll.u32 %v1696, 30
        %v1698 = vsub.s32 %v1694, %v1697
        %vm1699 = vcmp.lt.s32.totalorder %v1698, 0
        %v1700 = vsub.s32 0, %v1698
        %v1701 = vsel %vm1699, %v1700, %v1698
        %v1702 = vclz %v1701
        %v1703 = vsub.s32 %v1702, 2
        %vm1704 = vcmp.gt.s32.totalorder 0, %v1703
        %v1705 = vsel %vm1704, 0, %v1703
        %v1706 = vsub.s32 32, %v1705
        %v1707 = vshll.u32 %v1698, %v1705
        %v1708 = vshrl.u32 %v1690, %v1706
        %v1709 = vor.u32 %v1707, %v1708
        %v1710 = vsub.s32 4294967266, %v1705
        %v1711 = vadd.s32 %v1710, 127
        %v1712 = vshll.u32 %v1711, 23
        %v1713 = vor.u32 4788187, %v1712
        %v1714 = vand.u32 2147483647, %v1713
        %v1716 = vcvt.s32.f32 %v1709
        %v1717 = vmul.f32 %v1716, %v1714
        %v1718 = vxor.u32 %v1717, 2147483648
        %v1719 = vsel %vm1636, %v1718, %v1717
        %v1720 = vsub.s32 4, %v1696
        %v1721 = vsel %vm1636, %v1720, %v1696
        %v1722 = vsel %vm1635, %v382, %v1719
        %v1723 = vsel %vm1635, 0, %v1721
        %v1724 = vcosq.f32.pop %v1722
        %v1725 = vsinq.f32.pop %v1722
        %vm1726 = vweird.f32 %v382
        %v1727 = vadd.s32 %v1723, 3
        %v1728 = vand.u32 %v1727, 3
        %vm1729 = vcmp.lt.s32.totalorder %v1728, 2
        %vm1730 = vcmp.eq.s32.totalorder %v1728, 0
        %v1731 = vxor.u32 %v1725, 2147483648
        %v1732 = vsel %vm1730, %v1724, %v1731
        %vm1733 = vcmp.eq.s32.totalorder %v1728, 2
        %v1734 = vxor.u32 %v1724, 2147483648
        %v1735 = vsel %vm1733, %v1734, %v1725
        %v1736 = vsel %vm1729, %v1732, %v1735
        %v1737 = vsel %vm1726, nan, %v1736
        %v1738 = vand.u32 2147483647, %v383
        %vm1739 = vcmp.le.f32.partialorder %v1738, 0.7853982
        %vm1740 = vcmp.lt.s32.totalorder %v383, 0
        %v1741 = vand.u32 %v383, 2139095040
        %v1742 = vshrl.u32 %v1741, 23
        %v1743 = vsub.s32 %v1742, 127
        %v1744 = vand.u32 2147483647, %v383
        %v1745 = vand.u32 %v1744, 8388607
        %v1746 = vor.u32 %v1745, 8388608
        %v1747 = vsub.s32 0, %v1746
        %v1748 = vadd.s32 %v1743, 1
        %vm1749 = vcmp.gt.s32.totalorder %v1748, 0
        %v1750 = vsel %vm1749, %v1748, 0
        %v1751 = vshrl.u32 %v1750, 5
        %v1752 = vand.u32 %v1750, 31
        %v1753 = vsub.s32 32, %v1752
        %v1754 = vshrl.u32 683565275, %v1753
        %v1755 = vshll.u32 683565275, %v1752
        %v1756 = vshrl.u32 2475754826, %v1753
        %v1757 = vor.u32 %v1755, %v1756
        %v1758 = vshll.u32 2475754826, %v1752
        %v1759 = vshrl.u32 2131351028, %v1753
        %v1760 = vor.u32 %v1758, %v1759
        %v1761 = vshll.u32 2131351028, %v1752
        %v1762 = vshrl.u32 2102212464, %v1753
        %v1763 = vor.u32 %v1761, %v1762
        %v1764 = vshll.u32 2102212464, %v1752
        %v1765 = vshrl.u32 920167782, %v1753
        %v1766 = vor.u32 %v1764, %v1765
        %v1767 = vshll.u32 920167782, %v1752
        %v1768 = vshrl.u32 1326507024, %v1753
        %v1769 = vor.u32 %v1767, %v1768
        %vm1770 = vcmp.lt.s32.totalorder %v1751, 1
        %vm1771 = vcmp.lt.s32.totalorder %v1751, 2
        %vm1772 = vcmp.lt.s32.totalorder %v1751, 3
        %vm1773 = vcmp.lt.s32.totalorder %v1751, 4
        %v1774 = vsel %vm1770, %v1754, %v1757
        %v1775 = vsel %vm1773, %v1763, 2102212464
        %v1776 = vsel %vm1772, %v1760, %v1775
        %v1777 = vsel %vm1771, %v1774, %v1776
        %v1778 = vsel %vm1770, %v1757, %v1760
        %v1779 = vsel %vm1773, %v1766, 920167782
        %v1780 = vsel %vm1772, %v1763, %v1779
        %v1781 = vsel %vm1771, %v1778, %v1780
        %v1782 = vsel %vm1770, %v1760, %v1763
        %v1783 = vsel %vm1773, %v1769, 1326507024
        %v1784 = vsel %vm1772, %v1766, %v1783
        %v1785 = vsel %vm1771, %v1782, %v1784
        %v1786 = vshll.u32 %v1746, 8
        %v1787 = vmul.u32.u64.compose %v1786, %v1785
        %v1788 = vextract.low.u32 %v1787
        %v1789 = vextract.high.u32 %v1787
        %v1790 = vmul.u32.u64.compose %v1786, %v1781
        %v1791 = vextract.low.u32 %v1790
        %v1792 = vextract.high.u32 %v1790
        %v1793 = vmul.u32 %v1786, %v1777
        %v1794 = vadd.s32 %v1789, %v1791
        %vm1795 = vc.u32 %v1789, %v1791
        %v1796 = vadd.s32 %v1792, 1
        %v1797 = vsel %vm1795, %v1796, %v1792
        %v1798 = vadd.s32 %v1793, %v1797
        %v1799 = vadd.s32 %v1798, 536870912
        %v1800 = vshrl.u32 %v1799, 30
        %v1801 = vshll.u32 %v1800, 30
        %v1802 = vsub.s32 %v1798, %v1801
        %vm1803 = vcmp.lt.s32.totalorder %v1802, 0
        %v1804 = vsub.s32 0, %v1802
        %v1805 = vsel %vm1803, %v1804, %v1802
        %v1806 = vclz %v1805
        %v1807 = vsub.s32 %v1806, 2
        %vm1808 = vcmp.gt.s32.totalorder 0, %v1807
        %v1809 = vsel %vm1808, 0, %v1807
        %v1810 = vsub.s32 32, %v1809
        %v1811 = vshll.u32 %v1802, %v1809
        %v1812 = vshrl.u32 %v1794, %v1810
        %v1813 = vor.u32 %v1811, %v1812
        %v1814 = vsub.s32 4294967266, %v1809
        %v1815 = vadd.s32 %v1814, 127
        %v1816 = vshll.u32 %v1815, 23
        %v1817 = vor.u32 4788187, %v1816
        %v1818 = vand.u32 2147483647, %v1817
        %v1820 = vcvt.s32.f32 %v1813
        %v1821 = vmul.f32 %v1820, %v1818
        %v1822 = vxor.u32 %v1821, 2147483648
        %v1823 = vsel %vm1740, %v1822, %v1821
        %v1824 = vsub.s32 4, %v1800
        %v1825 = vsel %vm1740, %v1824, %v1800
        %v1826 = vsel %vm1739, %v383, %v1823
        %v1827 = vsel %vm1739, 0, %v1825
        %v1828 = vcosq.f32.pop %v1826
        %v1829 = vsinq.f32.pop %v1826
        %vm1830 = vweird.f32 %v383
        %v1831 = vadd.s32 %v1827, 3
        %v1832 = vand.u32 %v1831, 3
        %vm1833 = vcmp.lt.s32.totalorder %v1832, 2
        %vm1834 = vcmp.eq.s32.totalorder %v1832, 0
        %v1835 = vxor.u32 %v1829, 2147483648
        %v1836 = vsel %vm1834, %v1828, %v1835
        %vm1837 = vcmp.eq.s32.totalorder %v1832, 2
        %v1838 = vxor.u32 %v1828, 2147483648
        %v1839 = vsel %vm1837, %v1838, %v1829
        %v1840 = vsel %vm1833, %v1836, %v1839
        %v1841 = vsel %vm1830, nan, %v1840
        %v1842 = vand.u32 2147483647, %v384
        %vm1843 = vcmp.le.f32.partialorder %v1842, 0.7853982
        %vm1844 = vcmp.lt.s32.totalorder %v384, 0
        %v1845 = vand.u32 %v384, 2139095040
        %v1846 = vshrl.u32 %v1845, 23
        %v1847 = vsub.s32 %v1846, 127
        %v1848 = vand.u32 2147483647, %v384
        %v1849 = vand.u32 %v1848, 8388607
        %v1850 = vor.u32 %v1849, 8388608
        %v1851 = vsub.s32 0, %v1850
        %v1852 = vadd.s32 %v1847, 1
        %vm1853 = vcmp.gt.s32.totalorder %v1852, 0
        %v1854 = vsel %vm1853, %v1852, 0
        %v1855 = vshrl.u32 %v1854, 5
        %v1856 = vand.u32 %v1854, 31
        %v1857 = vsub.s32 32, %v1856
        %v1858 = vshrl.u32 683565275, %v1857
        %v1859 = vshll.u32 683565275, %v1856
        %v1860 = vshrl.u32 2475754826, %v1857
        %v1861 = vor.u32 %v1859, %v1860
        %v1862 = vshll.u32 2475754826, %v1856
        %v1863 = vshrl.u32 2131351028, %v1857
        %v1864 = vor.u32 %v1862, %v1863
        %v1865 = vshll.u32 2131351028, %v1856
        %v1866 = vshrl.u32 2102212464, %v1857
        %v1867 = vor.u32 %v1865, %v1866
        %v1868 = vshll.u32 2102212464, %v1856
        %v1869 = vshrl.u32 920167782, %v1857
        %v1870 = vor.u32 %v1868, %v1869
        %v1871 = vshll.u32 920167782, %v1856
        %v1872 = vshrl.u32 1326507024, %v1857
        %v1873 = vor.u32 %v1871, %v1872
        %vm1874 = vcmp.lt.s32.totalorder %v1855, 1
        %vm1875 = vcmp.lt.s32.totalorder %v1855, 2
        %vm1876 = vcmp.lt.s32.totalorder %v1855, 3
        %vm1877 = vcmp.lt.s32.totalorder %v1855, 4
        %v1878 = vsel %vm1874, %v1858, %v1861
        %v1879 = vsel %vm1877, %v1867, 2102212464
        %v1880 = vsel %vm1876, %v1864, %v1879
        %v1881 = vsel %vm1875, %v1878, %v1880
        %v1882 = vsel %vm1874, %v1861, %v1864
        %v1883 = vsel %vm1877, %v1870, 920167782
        %v1884 = vsel %vm1876, %v1867, %v1883
        %v1885 = vsel %vm1875, %v1882, %v1884
        %v1886 = vsel %vm1874, %v1864, %v1867
        %v1887 = vsel %vm1877, %v1873, 1326507024
        %v1888 = vsel %vm1876, %v1870, %v1887
        %v1889 = vsel %vm1875, %v1886, %v1888
        %v1890 = vshll.u32 %v1850, 8
        %v1891 = vmul.u32.u64.compose %v1890, %v1889
        %v1892 = vextract.low.u32 %v1891
        %v1893 = vextract.high.u32 %v1891
        %v1894 = vmul.u32.u64.compose %v1890, %v1885
        %v1895 = vextract.low.u32 %v1894
        %v1896 = vextract.high.u32 %v1894
        %v1897 = vmul.u32 %v1890, %v1881
        %v1898 = vadd.s32 %v1893, %v1895
        %vm1899 = vc.u32 %v1893, %v1895
        %v1900 = vadd.s32 %v1896, 1
        %v1901 = vsel %vm1899, %v1900, %v1896
        %v1902 = vadd.s32 %v1897, %v1901
        %v1903 = vadd.s32 %v1902, 536870912
        %v1904 = vshrl.u32 %v1903, 30
        %v1905 = vshll.u32 %v1904, 30
        %v1906 = vsub.s32 %v1902, %v1905
        %vm1907 = vcmp.lt.s32.totalorder %v1906, 0
        %v1908 = vsub.s32 0, %v1906
        %v1909 = vsel %vm1907, %v1908, %v1906
        %v1910 = vclz %v1909
        %v1911 = vsub.s32 %v1910, 2
        %vm1912 = vcmp.gt.s32.totalorder 0, %v1911
        %v1913 = vsel %vm1912, 0, %v1911
        %v1914 = vsub.s32 32, %v1913
        %v1915 = vshll.u32 %v1906, %v1913
        %v1916 = vshrl.u32 %v1898, %v1914
        %v1917 = vor.u32 %v1915, %v1916
        %v1918 = vsub.s32 4294967266, %v1913
        %v1919 = vadd.s32 %v1918, 127
        %v1920 = vshll.u32 %v1919, 23
        %v1921 = vor.u32 4788187, %v1920
        %v1922 = vand.u32 2147483647, %v1921
        %v1924 = vcvt.s32.f32 %v1917
        %v1925 = vmul.f32 %v1924, %v1922
        %v1926 = vxor.u32 %v1925, 2147483648
        %v1927 = vsel %vm1844, %v1926, %v1925
        %v1928 = vsub.s32 4, %v1904
        %v1929 = vsel %vm1844, %v1928, %v1904
        %v1930 = vsel %vm1843, %v384, %v1927
        %v1931 = vsel %vm1843, 0, %v1929
        %v1932 = vcosq.f32.pop %v1930
        %v1933 = vsinq.f32.pop %v1930
        %vm1934 = vweird.f32 %v384
        %v1935 = vadd.s32 %v1931, 3
        %v1936 = vand.u32 %v1935, 3
        %vm1937 = vcmp.lt.s32.totalorder %v1936, 2
        %vm1938 = vcmp.eq.s32.totalorder %v1936, 0
        %v1939 = vxor.u32 %v1933, 2147483648
        %v1940 = vsel %vm1938, %v1932, %v1939
        %vm1941 = vcmp.eq.s32.totalorder %v1936, 2
        %v1942 = vxor.u32 %v1932, 2147483648
        %v1943 = vsel %vm1941, %v1942, %v1933
        %v1944 = vsel %vm1937, %v1940, %v1943
        %v1945 = vsel %vm1934, nan, %v1944
        %v1946 = vand.u32 2147483647, %v385
        %vm1947 = vcmp.le.f32.partialorder %v1946, 0.7853982
        %vm1948 = vcmp.lt.s32.totalorder %v385, 0
        %v1949 = vand.u32 %v385, 2139095040
        %v1950 = vshrl.u32 %v1949, 23
        %v1951 = vsub.s32 %v1950, 127
        %v1952 = vand.u32 2147483647, %v385
        %v1953 = vand.u32 %v1952, 8388607
        %v1954 = vor.u32 %v1953, 8388608
        %v1955 = vsub.s32 0, %v1954
        %v1956 = vadd.s32 %v1951, 1
        %vm1957 = vcmp.gt.s32.totalorder %v1956, 0
        %v1958 = vsel %vm1957, %v1956, 0
        %v1959 = vshrl.u32 %v1958, 5
        %v1960 = vand.u32 %v1958, 31
        %v1961 = vsub.s32 32, %v1960
        %v1962 = vshrl.u32 683565275, %v1961
        %v1963 = vshll.u32 683565275, %v1960
        %v1964 = vshrl.u32 2475754826, %v1961
        %v1965 = vor.u32 %v1963, %v1964
        %v1966 = vshll.u32 2475754826, %v1960
        %v1967 = vshrl.u32 2131351028, %v1961
        %v1968 = vor.u32 %v1966, %v1967
        %v1969 = vshll.u32 2131351028, %v1960
        %v1970 = vshrl.u32 2102212464, %v1961
        %v1971 = vor.u32 %v1969, %v1970
        %v1972 = vshll.u32 2102212464, %v1960
        %v1973 = vshrl.u32 920167782, %v1961
        %v1974 = vor.u32 %v1972, %v1973
        %v1975 = vshll.u32 920167782, %v1960
        %v1976 = vshrl.u32 1326507024, %v1961
        %v1977 = vor.u32 %v1975, %v1976
        %vm1978 = vcmp.lt.s32.totalorder %v1959, 1
        %vm1979 = vcmp.lt.s32.totalorder %v1959, 2
        %vm1980 = vcmp.lt.s32.totalorder %v1959, 3
        %vm1981 = vcmp.lt.s32.totalorder %v1959, 4
        %v1982 = vsel %vm1978, %v1962, %v1965
        %v1983 = vsel %vm1981, %v1971, 2102212464
        %v1984 = vsel %vm1980, %v1968, %v1983
        %v1985 = vsel %vm1979, %v1982, %v1984
        %v1986 = vsel %vm1978, %v1965, %v1968
        %v1987 = vsel %vm1981, %v1974, 920167782
        %v1988 = vsel %vm1980, %v1971, %v1987
        %v1989 = vsel %vm1979, %v1986, %v1988
        %v1990 = vsel %vm1978, %v1968, %v1971
        %v1991 = vsel %vm1981, %v1977, 1326507024
        %v1992 = vsel %vm1980, %v1974, %v1991
        %v1993 = vsel %vm1979, %v1990, %v1992
        %v1994 = vshll.u32 %v1954, 8
        %v1995 = vmul.u32.u64.compose %v1994, %v1993
        %v1996 = vextract.low.u32 %v1995
        %v1997 = vextract.high.u32 %v1995
        %v1998 = vmul.u32.u64.compose %v1994, %v1989
        %v1999 = vextract.low.u32 %v1998
        %v2000 = vextract.high.u32 %v1998
        %v2001 = vmul.u32 %v1994, %v1985
        %v2002 = vadd.s32 %v1997, %v1999
        %vm2003 = vc.u32 %v1997, %v1999
        %v2004 = vadd.s32 %v2000, 1
        %v2005 = vsel %vm2003, %v2004, %v2000
        %v2006 = vadd.s32 %v2001, %v2005
        %v2007 = vadd.s32 %v2006, 536870912
        %v2008 = vshrl.u32 %v2007, 30
        %v2009 = vshll.u32 %v2008, 30
        %v2010 = vsub.s32 %v2006, %v2009
        %vm2011 = vcmp.lt.s32.totalorder %v2010, 0
        %v2012 = vsub.s32 0, %v2010
        %v2013 = vsel %vm2011, %v2012, %v2010
        %v2014 = vclz %v2013
        %v2015 = vsub.s32 %v2014, 2
        %vm2016 = vcmp.gt.s32.totalorder 0, %v2015
        %v2017 = vsel %vm2016, 0, %v2015
        %v2018 = vsub.s32 32, %v2017
        %v2019 = vshll.u32 %v2010, %v2017
        %v2020 = vshrl.u32 %v2002, %v2018
        %v2021 = vor.u32 %v2019, %v2020
        %v2022 = vsub.s32 4294967266, %v2017
        %v2023 = vadd.s32 %v2022, 127
        %v2024 = vshll.u32 %v2023, 23
        %v2025 = vor.u32 4788187, %v2024
        %v2026 = vand.u32 2147483647, %v2025
        %v2028 = vcvt.s32.f32 %v2021
        %v2029 = vmul.f32 %v2028, %v2026
        %v2030 = vxor.u32 %v2029, 2147483648
        %v2031 = vsel %vm1948, %v2030, %v2029
        %v2032 = vsub.s32 4, %v2008
        %v2033 = vsel %vm1948, %v2032, %v2008
        %v2034 = vsel %vm1947, %v385, %v2031
        %v2035 = vsel %vm1947, 0, %v2033
        %v2036 = vcosq.f32.pop %v2034
        %v2037 = vsinq.f32.pop %v2034
        %vm2038 = vweird.f32 %v385
        %v2039 = vadd.s32 %v2035, 3
        %v2040 = vand.u32 %v2039, 3
        %vm2041 = vcmp.lt.s32.totalorder %v2040, 2
        %vm2042 = vcmp.eq.s32.totalorder %v2040, 0
        %v2043 = vxor.u32 %v2037, 2147483648
        %v2044 = vsel %vm2042, %v2036, %v2043
        %vm2045 = vcmp.eq.s32.totalorder %v2040, 2
        %v2046 = vxor.u32 %v2036, 2147483648
        %v2047 = vsel %vm2045, %v2046, %v2037
        %v2048 = vsel %vm2041, %v2044, %v2047
        %v2049 = vsel %vm2038, nan, %v2048
        %2050 = vst [vmem:[#allocation2] sm:$0xff] %v489
        %2051 = vst [vmem:[#allocation2 + $0x8] sm:$0xff] %v593
        %2052 = vst [vmem:[#allocation2 + $0x10] sm:$0xff] %v697
        %2053 = vst [vmem:[#allocation2 + $0x18] sm:$0xff] %v801
        %2054 = vst [vmem:[#allocation2 + $0x20] sm:$0xff] %v905
        %2055 = vst [vmem:[#allocation2 + $0x28] sm:$0xff] %v1009
        %2056 = vst [vmem:[#allocation2 + $0x30] sm:$0xff] %v1113
        %2057 = vst [vmem:[#allocation2 + $0x38] sm:$0xff] %v1217
        %2058 = vst [vmem:[#allocation2 + $0x40] sm:$0xff] %v1321
        %2059 = vst [vmem:[#allocation2 + $0x48] sm:$0xff] %v1425
        %2060 = vst [vmem:[#allocation2 + $0x50] sm:$0xff] %v1529
        %2061 = vst [vmem:[#allocation2 + $0x58] sm:$0xff] %v1633
        %2062 = vst [vmem:[#allocation2 + $0x60] sm:$0xff] %v1737
        %2063 = vst [vmem:[#allocation2 + $0x68] sm:$0xff] %v1841
        %2064 = vst [vmem:[#allocation2 + $0x70] sm:$0xff] %v1945
        %2065 = vst [vmem:[#allocation2 + $0x78] sm:$0xff] %v2049
        %2066 = vst [vmem:[#allocation2 + $0x80] sm:$0xff] %v254
        %2067 = vst [vmem:[#allocation2 + $0x88] sm:$0xff] %v255
        %2068 = vst [vmem:[#allocation2 + $0x90] sm:$0xff] %v257
        %2069 = vst [vmem:[#allocation2 + $0x98] sm:$0xff] %v257
        %v2070 = vld [vmem:[%s4] sm:$0xff]
        %v2071 = vld [vmem:[%s4 + $0x8] sm:$0xff]
        %v2072 = vld [vmem:[#allocation2] sm:$0xff]
        %v2073 = vld [vmem:[#allocation2 + $0x8] sm:$0xff]
        %v2074 = vld [vmem:[#allocation2 + $0x10] sm:$0xff]
        %v2075 = vld [vmem:[#allocation2 + $0x18] sm:$0xff]
        %v2076 = vld [vmem:[#allocation2 + $0x20] sm:$0xff]
        %v2077 = vld [vmem:[#allocation2 + $0x28] sm:$0xff]
        %v2078 = vld [vmem:[#allocation2 + $0x30] sm:$0xff]
        %v2079 = vld [vmem:[#allocation2 + $0x38] sm:$0xff]
        %v2080 = vld [vmem:[#allocation2 + $0x40] sm:$0xff]
        %v2081 = vld [vmem:[#allocation2 + $0x48] sm:$0xff]
        %v2082 = vld [vmem:[#allocation2 + $0x50] sm:$0xff]
        %v2083 = vld [vmem:[#allocation2 + $0x58] sm:$0xff]
        %v2084 = vld [vmem:[#allocation2 + $0x60] sm:$0xff]
        %v2085 = vld [vmem:[#allocation2 + $0x68] sm:$0xff]
        %v2086 = vld [vmem:[#allocation2 + $0x70] sm:$0xff]
        %v2087 = vld [vmem:[#allocation2 + $0x78] sm:$0xff]
        %v2088 = vld [vmem:[#allocation2 + $0x80] sm:$0xff]
        %v2089 = vld [vmem:[#allocation2 + $0x88] sm:$0xff]
        %v2090 = vld [vmem:[#allocation2 + $0x90] sm:$0xff]
        %v2091 = vld [vmem:[#allocation2 + $0x98] sm:$0xff]
        %vm2092 = vcmask 654336
        %v2094 = vsel %vm2092, %v2070, 0
        %v2097 = vsel %vm2092, %v2071, 0
        %2099 = vmatprep.subr.mxu0 0.0
        %2100 = vmatpush1.msra.mxu0 0.0
        %2101 = vmatprep.subr.mxu0 0.0
        %2102 = vmatpush1.msra.mxu0 0.0
        %2103 = vmatprep.subr.mxu0 0.0
        %2104 = vmatpush1.msra.mxu0 0.0
        %2105 = vmatprep.subr.mxu0 0.0
        %2106 = vmatpush1.msra.mxu0 0.0
        %2107 = vmatprep.subr.mxu0 0.0
        %2108 = vmatpush1.msra.mxu0 0.0
        %2109 = vmatprep.subr.mxu0 0.0
        %2110 = vmatpush1.msra.mxu0 0.0
        %2111 = vmatprep.subr.mxu0 %v2091
        %2112 = vmatpush1.msra.mxu0 %v2090
        %2113 = vmatprep.subr.mxu0 %v2089
        %2114 = vmatpush1.msra.mxu0 %v2088
        %2115 = vmatprep.subr.mxu0 %v2087
        %2116 = vmatpush1.msra.mxu0 %v2086
        %2117 = vmatprep.subr.mxu0 %v2085
        %2118 = vmatpush1.msra.mxu0 %v2084
        %2119 = vmatprep.subr.mxu0 %v2083
        %2120 = vmatpush1.msra.mxu0 %v2082
        %2121 = vmatprep.subr.mxu0 %v2081
        %2122 = vmatpush1.msra.mxu0 %v2080
        %2123 = vmatprep.subr.mxu0 %v2079
        %2124 = vmatpush1.msra.mxu0 %v2078
        %2125 = vmatprep.subr.mxu0 %v2077
        %2126 = vmatpush1.msra.mxu0 %v2076
        %2127 = vmatprep.subr.mxu0 %v2075
        %2128 = vmatpush1.msra.mxu0 %v2074
        %2129 = vmatprep.subr.mxu0 %v2073
        %2130 = vmatpush1.msra.mxu0 %v2072
        %2131 = vmatprep.subr.mxu0 0.0
        %2132 = vmatpush2.msra.mxu0 0.0
        %2133 = vmatprep.subr.mxu0 0.0
        %2134 = vmatpush2.msra.mxu0 0.0
        %2135 = vmatprep.subr.mxu0 0.0
        %2136 = vmatpush2.msra.mxu0 0.0
        %2137 = vmatprep.subr.mxu0 0.0
        %2138 = vmatpush2.msra.mxu0 0.0
        %2139 = vmatprep.subr.mxu0 0.0
        %2140 = vmatpush2.msra.mxu0 0.0
        %2141 = vmatprep.subr.mxu0 0.0
        %2142 = vmatpush2.msra.mxu0 0.0
        %2143 = vmatprep.subr.mxu0 0.0
        %2144 = vmatpush2.msra.mxu0 0.0
        %2145 = vmatprep.subr.mxu0 0.0
        %2146 = vmatpush2.msra.mxu0 0.0
        %2147 = vmatprep.subr.mxu0 0.0
        %2148 = vmatpush2.msra.mxu0 0.0
        %2149 = vmatprep.subr.mxu0 0.0
        %2150 = vmatpush2.msra.mxu0 0.0
        %2151 = vmatprep.subr.mxu0 0.0
        %2152 = vmatpush2.msra.mxu0 0.0
        %2153 = vmatprep.subr.mxu0 0.0
        %2154 = vmatpush2.msra.mxu0 0.0
        %2155 = vmatprep.subr.mxu0 0.0
        %2156 = vmatpush2.msra.mxu0 0.0
        %2157 = vmatprep.subr.mxu0 0.0
        %2158 = vmatpush2.msra.mxu0 0.0
        %2159 = vmatprep.subr.mxu0 0.0
        %2160 = vmatpush2.msra.mxu0 0.0
        %2161 = vmatprep.subr.mxu0 0.0
        %2162 = vmatpush2.msra.mxu0 0.0
        %2163 = vmatprep.mubr.f32.mxu0 0.0
        %2164 = vmatmul.mubr.f32.gmra.mxu0 %v2094
        %v2165 = vpop.f32.mrf.mxu0
        %v2166 = vadd.f32 0.0, %v2165
        %v2167 = vpop.f32.mrf.mxu0
        %v2168 = vadd.f32 0.0, %v2167
        %2169 = vmatprep.mubr.f32.mxu0 0.0
        %2170 = vmatmul.mubr.f32.gmra.mxu0 %v2097
        %v2171 = vpop.f32.mrf.mxu0
        %v2172 = vadd.f32 0.0, %v2171
        %v2173 = vpop.f32.mrf.mxu0
        %v2174 = vadd.f32 0.0, %v2173
        %2175 = vdwg.mxu0
        %2176 = vst [vmem:[%s242] sm:$0xff] %v2166
        %2177 = vst [vmem:[%s242 + $0x8] sm:$0xff] %v2168
        %2178 = vst [vmem:[%s242 + $0x10] sm:$0xff] %v2172
        %2179 = vst [vmem:[%s242 + $0x18] sm:$0xff] %v2174
        %s2180 = sand.u32 %s153, 1
        %s2181 = scalar_lea.sflag [#allocation4], %s2180
        %s2182 = sand.u32 %s153, 1
        %s2183 = smul.addr %s2182, 32
        %s2184 = scalar_lea.vmem [#allocation3], %s2183
        // Predicated region
        $region41: #{tpu_custom_call.1} parent=39 // pred_check
          %p2185 = pneg %p163
        $region42: #{tpu_custom_call.1} parent=39 // pred_check_branch
          %2187 = sbr.rel (%p2185) target = $region44
        $region43: #{tpu_custom_call.1} parent=39 // pred_region
          %s2188 = smul.u32 2, %s24
          %s2190 = ssub.s32 512, 512
          %2191 = vsyncadd %s2181, %s2190
          %s2192 = smul.addr %s23, 4
          %s2193 = sadd.s32 %s2188, %s2192
          %s2194 = smul.addr %s2193, 128
          %s2195 = scalar_lea.hbm %s5, %s2194
          %s2196 = sshll.u32 %s2184, 4
          %s2197 = int_to_ptr.vmem [resolvable:$true] %s2196
          %2202 = dma.vmem_to_hbm [thread:$0]  %s2197, 512, %s2195, %s2181, 256, 256, 16
        $region44: #{tpu_custom_call.1} parent=39 // pred_fallthru
          _
      $region40: #{tpu_custom_call.1} parent=5 // pred_fallthru
        _
      %p2203 = scmp.le.s32.totalorder 2, %s14
      // Predicated region
      $region45: #{tpu_custom_call.1} parent=5 // pred_check
        %p2204 = pneg %p2203
      $region46: #{tpu_custom_call.1} parent=5 // pred_check_branch
        %2206 = sbr.rel (%p2204) target = $region48
      $region47: #{tpu_custom_call.1} parent=5 // pred_region
        %s2207 = ssub.s32 %s14, 2
        // Predicated region
        $region49: #{tpu_custom_call.1} parent=47 // pred_check
          %p2208 = pneg %p169
        $region50: #{tpu_custom_call.1} parent=47 // pred_check_branch
          %2210 = sbr.rel (%p2208) target = $region52
        $region51: #{tpu_custom_call.1} parent=47 // pred_region
          %s2211 = sand.u32 %s154, 1
          %s2212 = scalar_lea.sflag [#allocation4], %s2211
          %s2213 = sand.u32 %s154, 1
          %s2214 = smul.addr %s2213, 32
          %s2215 = scalar_lea.vmem [#allocation3], %s2214
          %2216 = dma.done %s2212, 512
        $region52: #{tpu_custom_call.1} parent=47 // pred_fallthru
          _
      $region48: #{tpu_custom_call.1} parent=5 // pred_fallthru
        _
    $region6: #{tpu_custom_call.1} parent=1 // loop_footer
      %s18 = sadd.s32 1, %s14
    $region7: #{tpu_custom_call.1} parent=1 // loop_footer_branch
      %13 = sbr.rel target = $region3
    $region8: #{tpu_custom_call.1} parent=1 // loop_exit
      _
    %2217 = vsyncpa [#allocation4], 1
    %s2218 = scalar_lea.sflag [#allocation4], 1
    %2219 = vsyncpa %s2218, 1

</llo_original>
